<compile_context>
chip_gen: v5e
topology: v5e:2x2
jax: 0.10.0
libtpu: 0.0.40
codegen_flags: <defaults>
</compile_context>

<pallas_src>
import math
import functools

import jax
import jax.numpy as jnp
from jax.experimental import pallas as pl
from jax.experimental.pallas import tpu as pltpu


_VMEM_LIMIT = 48 * 1024 * 1024   # < 64 MiB physical on v7x, plenty on v5e/v6e


# ----------------------------------------------------------------------------- utilities
def _pick_tile(dim, cap, align):
    """Largest multiple of `align` that divides `dim`, capped at `cap`.
    Falls back to the full dimension (full-extent blocks are always legal), so the grid
    always divides exactly and no zero-padding copies are needed."""
    if dim % align == 0:
        t = min(cap, dim)
        t = (t // align) * align
        while dim % t != 0:
            t -= align
        return t
    return dim


_KEY = [jax.random.PRNGKey(42)]


def next_key():
    _KEY[0], sub = jax.random.split(_KEY[0])
    return sub


def conv_w(kh, kw, cin, cout):
    # matches: m.weight.data.normal_(0, sqrt(2 / (kh*kw*cout))); stored bf16 for the MXU.
    n = kh * kw * cout
    std = math.sqrt(2.0 / n)
    w = jax.random.normal(next_key(), (kh, kw, cin, cout), jnp.float32) * std
    return w.astype(jnp.bfloat16)


def bn_params(c):
    # matches: weight.fill_(1), bias.zero_(), running_mean=0, running_var=1 (inference)
    return dict(gamma=jnp.ones((c,), jnp.float32),
                beta=jnp.zeros((c,), jnp.float32),
                mean=jnp.zeros((c,), jnp.float32),
                var=jnp.ones((c,), jnp.float32))


def bn_scale_bias(bn, eps=1e-5):
    scale = bn["gamma"] / jnp.sqrt(bn["var"] + eps)
    bias = bn["beta"] - bn["mean"] * scale
    return scale, bias


def _gelu_exact_f32(x):
    # exact (erf) GELU via Abramowitz-Stegun 7.1.26 erf polynomial (|err| < 1.5e-7);
    # only exp / arithmetic -> lowers cleanly, exp lands on the EUP slot.
    z = x * 0.7071067811865476
    az = jnp.abs(z)
    t = 1.0 / (1.0 + 0.3275911 * az)
    poly = t * (0.254829592 + t * (-0.284496736 + t * (1.421413741
             + t * (-1.453152027 + t * 1.061405429))))
    erf_abs = 1.0 - poly * jnp.exp(-az * az)
    erf = jnp.where(z >= 0.0, erf_abs, -erf_abs)
    return 0.5 * x * (1.0 + erf)


# ------------------------------------------------------------ fused matmul+BN(+res)(+act)
def _make_mm_kernel(act, has_res):
    def kernel(x_ref, w_ref, s_ref, b_ref, *rest):
        if has_res:
            r_ref, o_ref, acc_ref = rest
        else:
            o_ref, acc_ref = rest

        @pl.when(pl.program_id(2) == 0)
        def _():
            acc_ref[...] = jnp.zeros_like(acc_ref)

        # bf16 x bf16 -> f32 accumulation on the MXU
        acc_ref[...] += jnp.dot(x_ref[...], w_ref[...],
                                preferred_element_type=jnp.float32)

        @pl.when(pl.program_id(2) == pl.num_programs(2) - 1)
        def _():
            y = acc_ref[...] * s_ref[...] + b_ref[...]
            if has_res:
                y = y + r_ref[...].astype(jnp.float32)
            if act == "relu":
                y = jnp.maximum(y, 0.0)
            elif act == "gelu":
                y = _gelu_exact_f32(y)
            o_ref[...] = y.astype(o_ref.dtype)

    return kernel


def matmul_bn_act(x, w, scale, bias, act="none", residual=None,
                  out_dtype=jnp.bfloat16):
    """y = act((x @ w) * scale + bias [+ residual]); x:(M,K) w:(K,N) in bf16."""
    M, K = x.shape
    K2, N = w.shape
    assert K == K2
    x = x.astype(jnp.bfloat16)
    w = w.astype(jnp.bfloat16)

    tm = _pick_tile(M, 256, 8)
    tk = _pick_tile(K, 1024, 128)
    tn = _pick_tile(N, 512, 128)

    scale = scale.astype(jnp.float32).reshape(1, N)
    bias = bias.astype(jnp.float32).reshape(1, N)

    args = [x, w, scale, bias]
    in_specs = [
        pl.BlockSpec((tm, tk), lambda i, j, k: (i, k)),
        pl.BlockSpec((tk, tn), lambda i, j, k: (k, j)),
        pl.BlockSpec((1, tn), lambda i, j, k: (0, j)),
        pl.BlockSpec((1, tn), lambda i, j, k: (0, j)),
    ]
    has_res = residual is not None
    if has_res:
        args.append(residual.astype(jnp.bfloat16))
        in_specs.append(pl.BlockSpec((tm, tn), lambda i, j, k: (i, j)))

    grid = (M // tm, N // tn, K // tk)
    return pl.pallas_call(
        _make_mm_kernel(act, has_res),
        out_shape=jax.ShapeDtypeStruct((M, N), out_dtype),
        grid_spec=pltpu.PrefetchScalarGridSpec(
            num_scalar_prefetch=0,
            grid=grid,
            in_specs=in_specs,
            out_specs=pl.BlockSpec((tm, tn), lambda i, j, k: (i, j)),
            scratch_shapes=[pltpu.VMEM((tm, tn), jnp.float32)]),
        compiler_params=pltpu.CompilerParams(
            dimension_semantics=("parallel", "parallel", "arbitrary"),
            vmem_limit_bytes=_VMEM_LIMIT),
    )(*args)


# -------------------------------------------------------- NonLocal flash-style attention
def _nl_flash_kernel(th_ref, pht_ref, g_ref, o_ref, m_sc, l_sc, acc_sc, *, scale):
    kv = pl.program_id(2)

    @pl.when(kv == 0)
    def _():
        m_sc[...] = jnp.full_like(m_sc, -jnp.inf)
        l_sc[...] = jnp.zeros_like(l_sc)
        acc_sc[...] = jnp.zeros_like(acc_sc)

    # (tq, C/2) @ (C/2, tkv) -> (tq, tkv); phi is pre-transposed so contraction is
    # lane-contiguous (no in-kernel XLU transpose).
    s = jnp.dot(th_ref[0], pht_ref[0],
                preferred_element_type=jnp.float32) * scale
    m_prev = m_sc[...]
    m_new = jnp.maximum(m_prev, jnp.max(s, axis=-1, keepdims=True))
    alpha = jnp.exp(m_prev - m_new)
    p = jnp.exp(s - m_new)
    l_sc[...] = alpha * l_sc[...] + jnp.sum(p, axis=-1, keepdims=True)
    acc_sc[...] = alpha * acc_sc[...] + jnp.dot(
        p.astype(g_ref.dtype), g_ref[0], preferred_element_type=jnp.float32)
    m_sc[...] = m_new

    @pl.when(kv == pl.num_programs(2) - 1)
    def _():
        o_ref[0] = (acc_sc[...] *
                    pl.reciprocal(l_sc[...], approx=True)).astype(o_ref.dtype)


def nonlocal_attention(theta, phi_t, g, channels):
    """theta:(N,HW,C/2)  phi_t:(N,C/2,HW)  g:(N,HW,C)  (all bf16)  ->  (N,HW,C) bf16."""
    N, HW, C2 = theta.shape
    C = g.shape[-1]
    tq = _pick_tile(HW, 256, 8)
    tkv = _pick_tile(HW, 256, 128)
    kern = functools.partial(_nl_flash_kernel, scale=1.0 / math.sqrt(channels))
    return pl.pallas_call(
        kern,
        out_shape=jax.ShapeDtypeStruct((N, HW, C), jnp.bfloat16),
        grid_spec=pltpu.PrefetchScalarGridSpec(
            num_scalar_prefetch=0,
            grid=(N, HW // tq, HW // tkv),
            in_specs=[
                pl.BlockSpec((1, tq, C2), lambda b, qi, ki: (b, qi, 0)),
                pl.BlockSpec((1, C2, tkv), lambda b, qi, ki: (b, 0, ki)),
                pl.BlockSpec((1, tkv, C), lambda b, qi, ki: (b, ki, 0)),
            ],
            out_specs=pl.BlockSpec((1, tq, C), lambda b, qi, ki: (b, qi, 0)),
            scratch_shapes=[pltpu.VMEM((tq, 1), jnp.float32),
                            pltpu.VMEM((tq, 1), jnp.float32),
                            pltpu.VMEM((tq, C), jnp.float32)]),
        compiler_params=pltpu.CompilerParams(
            dimension_semantics=("parallel", "parallel", "arbitrary"),
            vmem_limit_bytes=_VMEM_LIMIT),
    )(theta, phi_t, g)


# ---------------------------------------------------------------------------- pool kernels
def _maxpool_kernel(p_ref, o_ref):
    m = p_ref[0]
    for i in range(1, 9):
        m = jnp.maximum(m, p_ref[i])
    o_ref[...] = m


def maxpool_9(patches):  # patches: (9, M, C) -> (M, C), tiled over M
    _, M, C = patches.shape
    tm = _pick_tile(M, 512, 8)
    return pl.pallas_call(
        _maxpool_kernel,
        out_shape=jax.ShapeDtypeStruct((M, C), patches.dtype),
        grid_spec=pltpu.PrefetchScalarGridSpec(
            num_scalar_prefetch=0,
            grid=(M // tm,),
            in_specs=[pl.BlockSpec((9, tm, C), lambda i: (0, i, 0))],
            out_specs=pl.BlockSpec((tm, C), lambda i: (i, 0))),
        compiler_params=pltpu.CompilerParams(
            dimension_semantics=("parallel",)),
    )(patches)


def _avgpool_kernel(x_ref, o_ref, *, hw):
    x = x_ref[0].astype(jnp.float32)                      # (HW, C)
    o_ref[...] = (jnp.sum(x, axis=0, keepdims=True) * (1.0 / hw)).astype(o_ref.dtype)


def global_avgpool(x):  # (N, HW, C) -> (N, C) bf16, one grid step per image
    N, HW, C = x.shape
    return pl.pallas_call(
        functools.partial(_avgpool_kernel, hw=HW),
        out_shape=jax.ShapeDtypeStruct((N, C), jnp.bfloat16),
        grid_spec=pltpu.PrefetchScalarGridSpec(
            num_scalar_prefetch=0,
            grid=(N,),
            in_specs=[pl.BlockSpec((1, HW, C), lambda b: (b, 0, 0))],
            out_specs=pl.BlockSpec((1, C), lambda b: (b, 0))),
        compiler_params=pltpu.CompilerParams(
            dimension_semantics=("parallel",)),
    )(x)


# --------------------------------------------------------------------------- conv helpers
def tf_pad_nhwc(x, kernel_size, stride):
    N, H, W, C = x.shape
    padH = max(kernel_size - stride, 0) if H % stride == 0 else max(kernel_size - H % stride, 0)
    padW = max(kernel_size - stride, 0) if W % stride == 0 else max(kernel_size - W % stride, 0)
    pt, pb = padH // 2, padH - padH // 2
    pleft, pright = padW // 2, padW - padW // 2
    return jnp.pad(x, ((0, 0), (pt, pb), (pleft, pright), (0, 0)))


def im2col(x, kh, kw, stride):
    N, H, W, C = x.shape
    Ho = (H - kh) // stride + 1
    Wo = (W - kw) // stride + 1
    cols = []
    for dy in range(kh):
        for dx in range(kw):
            cols.append(jax.lax.slice(
                x, (0, dy, dx, 0),
                (N, dy + stride * (Ho - 1) + 1, dx + stride * (Wo - 1) + 1, C),
                (1, stride, stride, 1)))
    p = jnp.stack(cols, axis=3)                       # (N, Ho, Wo, kh*kw, C)
    return p.reshape(N * Ho * Wo, kh * kw * C), (N, Ho, Wo)


def conv_bn_act(x, w, bn, stride=1, pad=0, tf_pad_k=None, act="none", residual=None):
    """x: NHWC, w: (kh,kw,Cin,Cout) bf16.  BN/residual/activation fused in the matmul."""
    kh, kw, Cin, Cout = w.shape
    x = x.astype(jnp.bfloat16)
    if tf_pad_k is not None:
        x = tf_pad_nhwc(x, tf_pad_k, stride)
    elif pad:
        x = jnp.pad(x, ((0, 0), (pad, pad), (pad, pad), (0, 0)))
    if kh == 1 and kw == 1:
        if stride > 1:
            x = x[:, ::stride, ::stride, :]
        N_, Ho, Wo, _ = x.shape
        x2d = x.reshape(N_ * Ho * Wo, Cin)
    else:
        # TODO(synk): im2col materializes kh*kw shifted copies (bf16); fold taps into the
        # matmul K reduction (element-offset index maps / manual DMA) in a future revision.
        x2d, (N_, Ho, Wo) = im2col(x, kh, kw, stride)
    if bn is not None:
        scale, bias = bn_scale_bias(bn)
    else:
        scale = jnp.ones((Cout,), jnp.float32)
        bias = jnp.zeros((Cout,), jnp.float32)
    res2d = (residual.astype(jnp.bfloat16).reshape(N_ * Ho * Wo, Cout)
             if residual is not None else None)
    y2d = matmul_bn_act(x2d, w.reshape(kh * kw * Cin, Cout), scale, bias,
                        act=act, residual=res2d)
    return y2d.reshape(N_, Ho, Wo, Cout)


# --------------------------------------------------------------------------- model pieces
EXPANSION = 4  # Bottleneck block (NonLocal(planes*4) in _make_layer implies expansion=4)


def make_bottleneck_params(inplanes, planes, stride, downsample):
    p = dict(conv1_w=conv_w(1, 1, inplanes, planes), bn1=bn_params(planes),
             conv2_w=conv_w(3, 3, planes, planes), bn2=bn_params(planes),
             conv3_w=conv_w(1, 1, planes, planes * EXPANSION),
             bn3=bn_params(planes * EXPANSION),
             stride=stride)
    if downsample:
        p["ds_w"] = conv_w(1, 1, inplanes, planes * EXPANSION)
        p["ds_bn"] = bn_params(planes * EXPANSION)
    return p


def bottleneck_forward(x, p):
    identity = x
    out = conv_bn_act(x, p["conv1_w"], p["bn1"], stride=1, act="relu")
    out = conv_bn_act(out, p["conv2_w"], p["bn2"], stride=p["stride"], pad=1, act="relu")
    if "ds_w" in p:
        identity = conv_bn_act(x, p["ds_w"], p["ds_bn"], stride=p["stride"], act="none")
    # relu(bn3(conv3(out)) + identity)  -- fully fused in the matmul epilogue
    out = conv_bn_act(out, p["conv3_w"], p["bn3"], stride=1, act="relu", residual=identity)
    return out


def make_nonlocal_params(channels):
    return dict(theta_w=conv_w(1, 1, channels, channels // 2),
                phi_w=conv_w(1, 1, channels, channels // 2),
                conv_w=conv_w(1, 1, channels, channels),
                bn=bn_params(channels),
                channels=channels)


def nonlocal_forward(x, p):
    N, H, W, C = x.shape
    res = x
    theta = conv_bn_act(x, p["theta_w"], None, act="none")     # (N,H,W,C/2) bf16
    phi = conv_bn_act(x, p["phi_w"], None, act="none")
    th = theta.reshape(N, H * W, C // 2)
    # pre-transpose phi so the attention contraction is lane-contiguous in the kernel
    ph_t = jnp.transpose(phi.reshape(N, H * W, C // 2), (0, 2, 1))
    gg = x.reshape(N, H * W, C).astype(jnp.bfloat16)
    f = nonlocal_attention(th, ph_t, gg, C).reshape(N, H, W, C)
    # conv -> bn -> + residual (fused)
    return conv_bn_act(f, p["conv_w"], p["bn"], act="none", residual=res)


def init_params(layers=(1, 1, 1, 1), num_classes=1000):
    params = dict(conv0_w=conv_w(7, 7, 3, 64), bn0=bn_params(64))
    inplanes = 64
    groups = []
    for planes, blocks, stride in zip((64, 128, 256, 512), layers, (1, 2, 2, 2)):
        g = []
        downsample = (stride != 1) or (inplanes != planes * EXPANSION)
        g.append(("bottleneck", make_bottleneck_params(inplanes, planes, stride, downsample)))
        inplanes = planes * EXPANSION
        for _ in range(1, blocks):
            g.append(("bottleneck", make_bottleneck_params(inplanes, planes, 1, False)))
        g.append(("nonlocal", make_nonlocal_params(planes * EXPANSION)))
        groups.append(g)
    params["groups"] = groups
    fan_in = 512 * EXPANSION
    bound = 1.0 / math.sqrt(fan_in)
    params["linear_w"] = jax.random.uniform(next_key(), (fan_in, num_classes),
                                            jnp.float32, -bound, bound).astype(jnp.bfloat16)
    params["linear_b"] = jax.random.uniform(next_key(), (num_classes,),
                                            jnp.float32, -bound, bound)
    return params


def forward(params, x_nchw):
    # PyTorch-style NCHW input; BGR channel swap like x[:, [2,1,0], :, :]
    x = x_nchw[:, jnp.array([2, 1, 0]), :, :]
    x = jnp.transpose(x, (0, 2, 3, 1)).astype(jnp.bfloat16)   # NCHW -> NHWC, bf16

    # stem: tf_pad(7,2) -> conv0(7x7/2) -> bn0 -> exact-erf GELU   (BN + GELU fused)
    x = conv_bn_act(x, params["conv0_w"], params["bn0"], stride=2, tf_pad_k=7, act="gelu")

    # maxpool: tf_pad(3,2) -> 3x3/2 max (window extraction in glue, tiled max in Pallas)
    x = tf_pad_nhwc(x, 3, 2)
    N, H, W, C = x.shape
    Ho, Wo = (H - 3) // 2 + 1, (W - 3) // 2 + 1
    cols = []
    for dy in range(3):
        for dx in range(3):
            cols.append(jax.lax.slice(
                x, (0, dy, dx, 0),
                (N, dy + 2 * (Ho - 1) + 1, dx + 2 * (Wo - 1) + 1, C),
                (1, 2, 2, 1)).reshape(N * Ho * Wo, C))
    x = maxpool_9(jnp.stack(cols, axis=0)).reshape(N, Ho, Wo, C)

    # residual groups (each = Bottleneck blocks + NonLocal denoise block)
    for g in params["groups"]:
        for kind, p in g:
            x = bottleneck_forward(x, p) if kind == "bottleneck" else nonlocal_forward(x, p)

    # adaptive avg pool (1,1) + linear (f32 logits)
    N, H, W, C = x.shape
    x = global_avgpool(x.reshape(N, H * W, C))                # (N, C) bf16
    num_classes = params["linear_w"].shape[1]
    logits = matmul_bn_act(x, params["linear_w"],
                           jnp.ones((num_classes,), jnp.float32),
                           params["linear_b"], act="none", out_dtype=jnp.float32)
    return logits


if __name__ == "__main__":
    params = init_params(layers=(1, 1, 1, 1), num_classes=1000)
    key = jax.random.PRNGKey(0)
    x = jax.random.normal(key, (2, 3, 64, 64), jnp.float32)   # small NCHW input
    out = forward(params, x)
    out = jax.block_until_ready(out)
    assert out.shape == (2, 1000), out.shape
    assert bool(jnp.all(jnp.isfinite(out)))
    print("KERNEL_OK")
</pallas_src>

<mosaic_0001>
module attributes {stable_mosaic.version = 11 : i64} {
  func.func @kernel(%arg0: i32, %arg1: i32, %arg2: i32, %arg3: memref<256x147xbf16, #tpu.memory_space<vmem>>, %arg4: memref<147x64xbf16, #tpu.memory_space<vmem>>, %arg5: memref<1x64xf32, #tpu.memory_space<vmem>>, %arg6: memref<1x64xf32, #tpu.memory_space<vmem>>, %arg7: memref<256x64xbf16, #tpu.memory_space<vmem>>, %arg8: memref<256x64xf32, #tpu.memory_space<vmem>>) attributes {dimension_semantics = [#tpu.dimension_semantics<parallel>, #tpu.dimension_semantics<parallel>, #tpu.dimension_semantics<arbitrary>], iteration_bounds = array<i64: 8, 1, 1>, scalar_prefetch = 0 : i64, scratch_operands = 1 : i64, tpu.core_type = #tpu.core_type<tc>, window_params = [{transform_indices = @transform_0, window_bounds = array<i64: 256, 147>}, {transform_indices = @transform_1, window_bounds = array<i64: 147, 64>}, {transform_indices = @transform_2, window_bounds = array<i64: 1, 64>}, {transform_indices = @transform_3, window_bounds = array<i64: 1, 64>}, {transform_indices = @transform_4, window_bounds = array<i64: 256, 64>}]} {
    %c0_i32 = arith.constant 0 : i32
    %0 = arith.cmpi eq, %arg2, %c0_i32 : i32
    %1 = arith.extui %0 : i1 to i32
    %c0_i32_0 = arith.constant 0 : i32
    %2 = arith.cmpi ne, %1, %c0_i32_0 : i32
    scf.if %2 {
      %cst_10 = arith.constant 0.000000e+00 : f32
      %12 = vector.broadcast %cst_10 : f32 to vector<256x64xf32>
      %c0_11 = arith.constant 0 : index
      %c0_12 = arith.constant 0 : index
      %13 = vector.load %arg8[%c0_11, %c0_12] : memref<256x64xf32, #tpu.memory_space<vmem>>, vector<256x64xf32>
      tpu.vector_store %arg8[%c0_11, %c0_12], %12 {strides = array<i32>} : memref<256x64xf32, #tpu.memory_space<vmem>>, vector<256x64xf32>,
    } else {
    }
    %c0 = arith.constant 0 : index
    %c0_1 = arith.constant 0 : index
    %3 = vector.load %arg8[%c0, %c0_1] : memref<256x64xf32, #tpu.memory_space<vmem>>, vector<256x64xf32>
    %c0_2 = arith.constant 0 : index
    %c0_3 = arith.constant 0 : index
    %4 = vector.load %arg3[%c0_2, %c0_3] : memref<256x147xbf16, #tpu.memory_space<vmem>>, vector<256x147xbf16>
    %c0_4 = arith.constant 0 : index
    %c0_5 = arith.constant 0 : index
    %5 = vector.load %arg4[%c0_4, %c0_5] : memref<147x64xbf16, #tpu.memory_space<vmem>>, vector<147x64xbf16>
    %cst = arith.constant dense<0.000000e+00> : vector<256x64xf32>
    %6 = tpu.matmul %4, %5, %cst {dimension_numbers = #tpu.dot_dimension_numbers<[1], [0], [0], [1], [0, 0, 1, 1], [], []>} : vector<256x147xbf16>, vector<147x64xbf16>, vector<256x64xf32> -> vector<256x64xf32>
    %7 = arith.addf %3, %6 : vector<256x64xf32>
    %c0_6 = arith.constant 0 : index
    %c0_7 = arith.constant 0 : index
    %8 = vector.load %arg8[%c0_6, %c0_7] : memref<256x64xf32, #tpu.memory_space<vmem>>, vector<256x64xf32>
    tpu.vector_store %arg8[%c0_6, %c0_7], %7 {strides = array<i32>} : memref<256x64xf32, #tpu.memory_space<vmem>>, vector<256x64xf32>,
    %c0_i32_8 = arith.constant 0 : i32
    %9 = arith.cmpi eq, %arg2, %c0_i32_8 : i32
    %10 = arith.extui %9 : i1 to i32
    %c0_i32_9 = arith.constant 0 : i32
    %11 = arith.cmpi ne, %10, %c0_i32_9 : i32
    scf.if %11 {
      %c0_10 = arith.constant 0 : index
      %c0_11 = arith.constant 0 : index
      %12 = vector.load %arg8[%c0_10, %c0_11] : memref<256x64xf32, #tpu.memory_space<vmem>>, vector<256x64xf32>
      %c0_12 = arith.constant 0 : index
      %c0_13 = arith.constant 0 : index
      %13 = vector.load %arg5[%c0_12, %c0_13] : memref<1x64xf32, #tpu.memory_space<vmem>>, vector<1x64xf32>
      %14 = vector.broadcast %13 : vector<1x64xf32> to vector<256x64xf32>
      %15 = arith.mulf %12, %14 : vector<256x64xf32>
      %c0_14 = arith.constant 0 : index
      %c0_15 = arith.constant 0 : index
      %16 = vector.load %arg6[%c0_14, %c0_15] : memref<1x64xf32, #tpu.memory_space<vmem>>, vector<1x64xf32>
      %17 = vector.broadcast %16 : vector<1x64xf32> to vector<256x64xf32>
      %18 = arith.addf %15, %17 : vector<256x64xf32>
      %cst_16 = arith.constant 0.707106769 : f32
      %19 = vector.broadcast %cst_16 : f32 to vector<256x64xf32>
      %20 = arith.mulf %18, %19 : vector<256x64xf32>
      %21 = math.absf %20 : vector<256x64xf32>
      %cst_17 = arith.constant 0.327591091 : f32
      %22 = vector.broadcast %cst_17 : f32 to vector<256x64xf32>
      %23 = arith.mulf %22, %21 : vector<256x64xf32>
      %cst_18 = arith.constant 1.000000e+00 : f32
      %24 = vector.broadcast %cst_18 : f32 to vector<256x64xf32>
      %25 = arith.addf %24, %23 : vector<256x64xf32>
      %cst_19 = arith.constant 1.000000e+00 : f32
      %26 = vector.broadcast %cst_19 : f32 to vector<256x64xf32>
      %27 = arith.divf %26, %25 : vector<256x64xf32>
      %cst_20 = arith.constant 1.06140542 : f32
      %28 = vector.broadcast %cst_20 : f32 to vector<256x64xf32>
      %29 = arith.mulf %27, %28 : vector<256x64xf32>
      %cst_21 = arith.constant -1.45315206 : f32
      %30 = vector.broadcast %cst_21 : f32 to vector<256x64xf32>
      %31 = arith.addf %30, %29 : vector<256x64xf32>
      %32 = arith.mulf %27, %31 : vector<256x64xf32>
      %cst_22 = arith.constant 1.42141378 : f32
      %33 = vector.broadcast %cst_22 : f32 to vector<256x64xf32>
      %34 = arith.addf %33, %32 : vector<256x64xf32>
      %35 = arith.mulf %27, %34 : vector<256x64xf32>
      %cst_23 = arith.constant -0.284496725 : f32
      %36 = vector.broadcast %cst_23 : f32 to vector<256x64xf32>
      %37 = arith.addf %36, %35 : vector<256x64xf32>
      %38 = arith.mulf %27, %37 : vector<256x64xf32>
      %cst_24 = arith.constant 0.254829586 : f32
      %39 = vector.broadcast %cst_24 : f32 to vector<256x64xf32>
      %40 = arith.addf %39, %38 : vector<256x64xf32>
      %41 = arith.mulf %27, %40 : vector<256x64xf32>
      %cst_25 = arith.constant 0.000000e+00 : f32
      %42 = vector.broadcast %cst_25 : f32 to vector<256x64xf32>
      %43 = arith.subf %42, %21 : vector<256x64xf32>
      %44 = arith.mulf %43, %21 : vector<256x64xf32>
      %45 = math.exp %44 : vector<256x64xf32>
      %46 = arith.mulf %41, %45 : vector<256x64xf32>
      %cst_26 = arith.constant 1.000000e+00 : f32
      %47 = vector.broadcast %cst_26 : f32 to vector<256x64xf32>
      %48 = arith.subf %47, %46 : vector<256x64xf32>
      %cst_27 = arith.constant 0.000000e+00 : f32
      %49 = vector.broadcast %cst_27 : f32 to vector<256x64xf32>
      %50 = arith.cmpf oge, %20, %49 : vector<256x64xf32>
      %cst_28 = arith.constant 0.000000e+00 : f32
      %51 = vector.broadcast %cst_28 : f32 to vector<256x64xf32>
      %52 = arith.subf %51, %48 : vector<256x64xf32>
      %53 = arith.select %50, %48, %52 : vector<256x64xi1>, vector<256x64xf32>
      %cst_29 = arith.constant 5.000000e-01 : f32
      %54 = vector.broadcast %cst_29 : f32 to vector<256x64xf32>
      %55 = arith.mulf %54, %18 : vector<256x64xf32>
      %cst_30 = arith.constant 1.000000e+00 : f32
      %56 = vector.broadcast %cst_30 : f32 to vector<256x64xf32>
      %57 = arith.addf %56, %53 : vector<256x64xf32>
      %58 = arith.mulf %55, %57 : vector<256x64xf32>
      %59 = arith.truncf %58 : vector<256x64xf32> to vector<256x64xbf16>
      %c0_31 = arith.constant 0 : index
      %c0_32 = arith.constant 0 : index
      %60 = vector.load %arg7[%c0_31, %c0_32] : memref<256x64xbf16, #tpu.memory_space<vmem>>, vector<256x64xbf16>
      tpu.vector_store %arg7[%c0_31, %c0_32], %59 {strides = array<i32>} : memref<256x64xbf16, #tpu.memory_space<vmem>>, vector<256x64xbf16>,
    } else {
    }
    return
  }
  func.func @transform_0(%arg0: i32, %arg1: i32, %arg2: i32) -> (i32, i32) {
    %c0_i32 = arith.constant 0 : i32
    return %arg0, %arg2 : i32, i32
  }
  func.func @transform_1(%arg0: i32, %arg1: i32, %arg2: i32) -> (i32, i32) {
    %c0_i32 = arith.constant 0 : i32
    return %arg2, %arg1 : i32, i32
  }
  func.func @transform_2(%arg0: i32, %arg1: i32, %arg2: i32) -> (i32, i32) {
    %c0_i32 = arith.constant 0 : i32
    %c0_i32_0 = arith.constant 0 : i32
    return %c0_i32, %arg1 : i32, i32
  }
  func.func @transform_3(%arg0: i32, %arg1: i32, %arg2: i32) -> (i32, i32) {
    %c0_i32 = arith.constant 0 : i32
    %c0_i32_0 = arith.constant 0 : i32
    return %c0_i32, %arg1 : i32, i32
  }
  func.func @transform_4(%arg0: i32, %arg1: i32, %arg2: i32) -> (i32, i32) {
    %c0_i32 = arith.constant 0 : i32
    return %arg0, %arg1 : i32, i32
  }
}

</mosaic_0001>

<llo_original>
// kernel: tpu_custom_call.1
$region0: #{tpu_custom_call.1}
  #allocation0 [shape = 'u32[]', space=smem, size = 0x4, offset = 0x4, fixed_abs, tag = 'smem constant byte address 0x4 - core index']
  #allocation1 [shape = 'u32[72,128]{1,0:T(1,128)}', space=vmem, size = 0x9000, scoped, tag = 'internal scratch']
  #allocation2 [shape = 'f32[256,64]{1,0:T(8,128)}', space=vmem, size = 0x20000, scoped, tag = 'scratch operand']
  %s0 = inlined_call_operand.vmem [shape: bf16[2048,147], index: 0, kind: input, shape index: {}]
  %s1 = inlined_call_operand.vmem [shape: bf16[147,64], index: 1, kind: input, shape index: {}]
  %s2 = inlined_call_operand.vmem [shape: f32[1,64], index: 2, kind: input, shape index: {}]
  %s3 = inlined_call_operand.vmem [shape: f32[1,64], index: 3, kind: input, shape index: {}]
  %s4 = inlined_call_operand.vmem [shape: bf16[2048,64], index: 4, kind: output, shape index: {}]
  %s5 = sld [smem:[#allocation0]]
  $region57: #{tpu_custom_call.1} parent=0
    _
  %s7 = ssub.s32 1, %s5
  %s8 = scalar_select 0, %s7, %s5
  loop: start=0, step=1, limit=10
  $region2: #{tpu_custom_call.1} parent=0 // loop_pre_header
    _
  $region3: #{tpu_custom_call.1} parent=0 // loop_header
    %s10 = sphi 0, %s14
    %p11 = scmp.ge.s32.totalorder %s10, 10
    %s17 = sphi 0, %s36
    %s18 = sphi 0, %s32
    %s19 = sphi 0, %s28
    %s20 = sphi 0, %s17
    %s21 = sphi 0, %s18
    %s22 = sphi 0, %s19
    %s23 = sphi 0, %s20
    %s24 = sphi 0, %s21
    %s25 = sphi 0, %s22
    %s41 = sphi 0, %s43
    %s44 = sphi 0, %s41
    %s45 = sphi 0, %s44
    %s61 = sphi 0, %s45
    %s69 = sphi 0, %s71
    %s72 = sphi 0, %s69
    %s73 = sphi 0, %s72
    %s89 = sphi 0, %s73
    %s95 = sphi 0, %s97
    %s98 = sphi 0, %s95
    %s99 = sphi 0, %s98
    %s115 = sphi 0, %s99
    %s121 = sphi 0, %s123
    %s124 = sphi 0, %s121
    %s125 = sphi 0, %s124
    %s141 = sphi 0, %s125
    %s149 = sphi 0, %s151
    %s152 = sphi 0, %s149
    %s153 = sphi 0, %s152
    %s169 = sphi 0, %s153
  $region4: #{tpu_custom_call.1} parent=0 // loop_header_branch
    %13 = sbr.rel (%p11) target = $region8
  $region5: #{tpu_custom_call.1} parent=0 // loop_body
    %s15 = ssub.s32 %s10, 1
    %s16 = ssub.s32 %s10, 2
    %s26 = sadd.s32 1, %s19
    %p27 = scmp.ge.s32.totalorder %s26, 1
    %s28 = scalar_select %p27, 0, %s26
    %s29 = sadd.s32 1, %s18
    %s30 = scalar_select %p27, %s29, %s18
    %p31 = scmp.ge.s32.totalorder %s30, 1
    %s32 = scalar_select %p31, 0, %s30
    %s33 = sadd.s32 1, %s17
    %s34 = scalar_select %p31, %s33, %s17
    %p35 = scmp.ge.s32.totalorder %s34, 8
    %s36 = scalar_select %p35, 0, %s34
    %s37 = ssub.s32 %s17, %s36
    %s38 = ssub.s32 %s19, %s28
    %s39 = sor.u32 %s37, %s38
    %p40 = scmp.eq.s32.totalorder %s39, 0
    %s42 = sadd.s32 %s41, 1
    %s43 = scalar_select %p40, %s41, %s42
    %p46 = pneg %p40
    %p47 = scmp.eq.s32.totalorder %s10, 7
    %p48 = por %p46, %p47
    %p49 = scmp.ne.s32.totalorder %s41, %s44
    %p50 = scmp.eq.s32.totalorder %s10, 0
    %p51 = por %p49, %p50
    %p52 = scmp.ne.s32.totalorder %s41, %s44
    %p53 = scmp.eq.s32.totalorder %s15, 7
    %p54 = por %p52, %p53
    %p55 = scmp.ne.s32.totalorder %s44, %s45
    %p56 = scmp.eq.s32.totalorder %s15, 0
    %p57 = por %p55, %p56
    %p58 = scmp.ne.s32.totalorder %s44, %s45
    %p59 = scmp.eq.s32.totalorder %s16, 7
    %p60 = por %p58, %p59
    %p62 = scmp.ne.s32.totalorder %s45, %s61
    %p63 = scmp.eq.s32.totalorder %s16, 0
    %p64 = por %p62, %p63
    %s65 = ssub.s32 %s19, %s28
    %s66 = ssub.s32 %s18, %s32
    %s67 = sor.u32 %s65, %s66
    %p68 = scmp.eq.s32.totalorder %s67, 0
    %s70 = sadd.s32 %s69, 1
    %s71 = scalar_select %p68, %s69, %s70
    %p74 = pneg %p68
    %p75 = scmp.eq.s32.totalorder %s10, 7
    %p76 = por %p74, %p75
    %p77 = scmp.ne.s32.totalorder %s69, %s72
    %p78 = scmp.eq.s32.totalorder %s10, 0
    %p79 = por %p77, %p78
    %p80 = scmp.ne.s32.totalorder %s69, %s72
    %p81 = scmp.eq.s32.totalorder %s15, 7
    %p82 = por %p80, %p81
    %p83 = scmp.ne.s32.totalorder %s72, %s73
    %p84 = scmp.eq.s32.totalorder %s15, 0
    %p85 = por %p83, %p84
    %p86 = scmp.ne.s32.totalorder %s72, %s73
    %p87 = scmp.eq.s32.totalorder %s16, 7
    %p88 = por %p86, %p87
    %p90 = scmp.ne.s32.totalorder %s73, %s89
    %p91 = scmp.eq.s32.totalorder %s16, 0
    %p92 = por %p90, %p91
    %s93 = ssub.s32 %s18, %s32
    %p94 = scmp.eq.s32.totalorder %s93, 0
    %s96 = sadd.s32 %s95, 1
    %s97 = scalar_select %p94, %s95, %s96
    %p100 = pneg %p94
    %p101 = scmp.eq.s32.totalorder %s10, 7
    %p102 = por %p100, %p101
    %p103 = scmp.ne.s32.totalorder %s95, %s98
    %p104 = scmp.eq.s32.totalorder %s10, 0
    %p105 = por %p103, %p104
    %p106 = scmp.ne.s32.totalorder %s95, %s98
    %p107 = scmp.eq.s32.totalorder %s15, 7
    %p108 = por %p106, %p107
    %p109 = scmp.ne.s32.totalorder %s98, %s99
    %p110 = scmp.eq.s32.totalorder %s15, 0
    %p111 = por %p109, %p110
    %p112 = scmp.ne.s32.totalorder %s98, %s99
    %p113 = scmp.eq.s32.totalorder %s16, 7
    %p114 = por %p112, %p113
    %p116 = scmp.ne.s32.totalorder %s99, %s115
    %p117 = scmp.eq.s32.totalorder %s16, 0
    %p118 = por %p116, %p117
    %s119 = ssub.s32 %s18, %s32
    %p120 = scmp.eq.s32.totalorder %s119, 0
    %s122 = sadd.s32 %s121, 1
    %s123 = scalar_select %p120, %s121, %s122
    %p126 = pneg %p120
    %p127 = scmp.eq.s32.totalorder %s10, 7
    %p128 = por %p126, %p127
    %p129 = scmp.ne.s32.totalorder %s121, %s124
    %p130 = scmp.eq.s32.totalorder %s10, 0
    %p131 = por %p129, %p130
    %p132 = scmp.ne.s32.totalorder %s121, %s124
    %p133 = scmp.eq.s32.totalorder %s15, 7
    %p134 = por %p132, %p133
    %p135 = scmp.ne.s32.totalorder %s124, %s125
    %p136 = scmp.eq.s32.totalorder %s15, 0
    %p137 = por %p135, %p136
    %p138 = scmp.ne.s32.totalorder %s124, %s125
    %p139 = scmp.eq.s32.totalorder %s16, 7
    %p140 = por %p138, %p139
    %p142 = scmp.ne.s32.totalorder %s125, %s141
    %p143 = scmp.eq.s32.totalorder %s16, 0
    %p144 = por %p142, %p143
    %s145 = ssub.s32 %s17, %s36
    %s146 = ssub.s32 %s18, %s32
    %s147 = sor.u32 %s145, %s146
    %p148 = scmp.eq.s32.totalorder %s147, 0
    %s150 = sadd.s32 %s149, 1
    %s151 = scalar_select %p148, %s149, %s150
    %p154 = pneg %p148
    %p155 = scmp.eq.s32.totalorder %s10, 7
    %p156 = por %p154, %p155
    %p157 = scmp.ne.s32.totalorder %s149, %s152
    %p158 = scmp.eq.s32.totalorder %s10, 0
    %p159 = por %p157, %p158
    %p160 = scmp.ne.s32.totalorder %s149, %s152
    %p161 = scmp.eq.s32.totalorder %s15, 7
    %p162 = por %p160, %p161
    %p163 = scmp.ne.s32.totalorder %s152, %s153
    %p164 = scmp.eq.s32.totalorder %s15, 0
    %p165 = por %p163, %p164
    %p166 = scmp.ne.s32.totalorder %s152, %s153
    %p167 = scmp.eq.s32.totalorder %s16, 7
    %p168 = por %p166, %p167
    %p170 = scmp.ne.s32.totalorder %s153, %s169
    %p171 = scmp.eq.s32.totalorder %s16, 0
    %p172 = por %p170, %p171
    %p173 = scmp.le.s32.totalorder 1, %s10
    %p174 = scmp.lt.s32.totalorder %s10, 9
    %p175 = pnand %p173, %p174
    %p176 = pneg %p175
    // Predicated region
    $region9: #{tpu_custom_call.1} parent=5 // pred_check
      _
    $region10: #{tpu_custom_call.1} parent=5 // pred_check_branch
      %178 = sbr.rel (%p175) target = $region12
    $region11: #{tpu_custom_call.1} parent=5 // pred_region
      %s179 = ssub.s32 %s10, 1
      // Predicated region
      $region13: #{tpu_custom_call.1} parent=11 // pred_check
        %p180 = pneg %p85
      $region14: #{tpu_custom_call.1} parent=11 // pred_check_branch
        %182 = sbr.rel (%p180) target = $region16
      $region15: #{tpu_custom_call.1} parent=11 // pred_region
        %s183 = smul.u32 19, %s22
        %p184 = scmp.lt.s32.totalorder %s183, 18
        %s185 = scalar_select %p184, %s183, 18
        %p186 = scmp.lt.s32.totalorder %s21, 0
        %s187 = scalar_select %p186, %s21, 0
        %s188 = sadd.s32 %s187, %s185
        %s189 = smul.addr %s188, 4
        %s190 = scalar_lea.vmem %s1, %s189
        %s191 = smul.u32 19, %s22
      $region16: #{tpu_custom_call.1} parent=11 // pred_fallthru
        _
      // Predicated region
      $region17: #{tpu_custom_call.1} parent=11 // pred_check
        %p192 = pneg %p111
      $region18: #{tpu_custom_call.1} parent=11 // pred_check_branch
        %194 = sbr.rel (%p192) target = $region20
      $region19: #{tpu_custom_call.1} parent=11 // pred_region
        %p195 = scmp.lt.s32.totalorder %s21, 0
        %s196 = scalar_select %p195, %s21, 0
        %s197 = scalar_lea.vmem %s2, %s196
      $region20: #{tpu_custom_call.1} parent=11 // pred_fallthru
        _
      // Predicated region
      $region21: #{tpu_custom_call.1} parent=11 // pred_check
        %p198 = pneg %p137
      $region22: #{tpu_custom_call.1} parent=11 // pred_check_branch
        %200 = sbr.rel (%p198) target = $region24
      $region23: #{tpu_custom_call.1} parent=11 // pred_region
        %p201 = scmp.lt.s32.totalorder %s21, 0
        %s202 = scalar_select %p201, %s21, 0
        %s203 = scalar_lea.vmem %s3, %s202
      $region24: #{tpu_custom_call.1} parent=11 // pred_fallthru
        _
    $region12: #{tpu_custom_call.1} parent=5 // pred_fallthru
      _
    %p204 = scmp.lt.s32.totalorder %s10, 8
    // Predicated region
    $region25: #{tpu_custom_call.1} parent=5 // pred_check
      %p205 = pneg %p204
    $region26: #{tpu_custom_call.1} parent=5 // pred_check_branch
      %207 = sbr.rel (%p205) target = $region28
    $region27: #{tpu_custom_call.1} parent=5 // pred_region
      // Predicated region
      $region29: #{tpu_custom_call.1} parent=27 // pred_check
        %p208 = pneg %p51
      $region30: #{tpu_custom_call.1} parent=27 // pred_check_branch
        %210 = sbr.rel (%p208) target = $region32
      $region31: #{tpu_custom_call.1} parent=27 // pred_region
        %s211 = smul.u32 32, %s17
        %s212 = smul.u32 2, %s19
        %p213 = scmp.lt.s32.totalorder %s211, 255
        %s214 = scalar_select %p213, %s211, 255
        %p215 = scmp.lt.s32.totalorder %s212, 1
        %s216 = scalar_select %p215, %s212, 1
        %s217 = smul.addr %s214, 2
        %s218 = sadd.s32 %s216, %s217
        %s219 = smul.addr %s218, 4
        %s220 = scalar_lea.vmem %s0, %s219
        %s221 = smul.u32 32, %s17
        %s222 = smul.u32 2, %s19
      $region32: #{tpu_custom_call.1} parent=27 // pred_fallthru
        _
    $region28: #{tpu_custom_call.1} parent=5 // pred_fallthru
      _
    %p223 = scmp.le.s32.totalorder 1, %s10
    %p224 = scmp.lt.s32.totalorder %s10, 9
    %p225 = pnand %p223, %p224
    %p226 = pneg %p225
    // Predicated region
    $region33: #{tpu_custom_call.1} parent=5 // pred_check
      _
    $region34: #{tpu_custom_call.1} parent=5 // pred_check_branch
      %228 = sbr.rel (%p225) target = $region36
    $region35: #{tpu_custom_call.1} parent=5 // pred_region
      %s229 = ssub.s32 %s10, 1
      %s230 = smul.u32 32, %s20
      %s231 = smul.u32 2, %s22
      %p232 = scmp.lt.s32.totalorder %s230, 255
      %s233 = scalar_select %p232, %s230, 255
      %p234 = scmp.lt.s32.totalorder %s231, 1
      %s235 = scalar_select %p234, %s231, 1
      %s236 = smul.addr %s233, 2
      %s237 = sadd.s32 %s235, %s236
      %s238 = smul.addr %s237, 4
      %s239 = scalar_lea.vmem %s0, %s238
      %p240 = pneg %p57
      %p241 = pneg %p54
      %s242 = smul.u32 19, %s22
      %p243 = scmp.lt.s32.totalorder %s242, 18
      %s244 = scalar_select %p243, %s242, 18
      %p245 = scmp.lt.s32.totalorder %s21, 0
      %s246 = scalar_select %p245, %s21, 0
      %s247 = sadd.s32 %s246, %s244
      %s248 = smul.addr %s247, 4
      %s249 = scalar_lea.vmem %s1, %s248
      %p250 = pneg %p85
      %p251 = pneg %p82
      %p252 = scmp.lt.s32.totalorder %s21, 0
      %s253 = scalar_select %p252, %s21, 0
      %s254 = scalar_lea.vmem %s2, %s253
      %p255 = pneg %p111
      %p256 = pneg %p108
      %p257 = scmp.lt.s32.totalorder %s21, 0
      %s258 = scalar_select %p257, %s21, 0
      %s259 = scalar_lea.vmem %s3, %s258
      %p260 = pneg %p137
      %p261 = pneg %p134
      %p262 = pneg %p165
      %p263 = pneg %p162
      %s264 = smul.u32 32, %s20
      %p265 = scmp.lt.s32.totalorder %s264, 255
      %s266 = scalar_select %p265, %s264, 255
      %p267 = scmp.lt.s32.totalorder %s21, 0
      %s268 = scalar_select %p267, %s21, 0
      %s269 = sadd.s32 %s268, %s266
      %s270 = smul.addr %s269, 4
      %s271 = scalar_lea.vmem %s4, %s270
      %s272 = smul.u32 32, %s20
      %s273 = smul.u32 2, %s22
      %p274 = scmp.lt.s32.totalorder %s272, 255
      %s275 = scalar_select %p274, %s272, 255
      %p276 = scmp.lt.s32.totalorder %s273, 1
      %s277 = scalar_select %p276, %s273, 1
      %s278 = smul.addr %s275, 2
      %s279 = sadd.s32 %s277, %s278
      %s280 = smul.addr %s279, 4
      %s281 = scalar_lea.vmem %s0, %s280
      %s282 = smul.u32 32, %s20
      %s283 = smul.u32 2, %s22
      %s284 = smul.u32 19, %s22
      %p285 = scmp.lt.s32.totalorder %s284, 18
      %s286 = scalar_select %p285, %s284, 18
      %p287 = scmp.lt.s32.totalorder %s21, 0
      %s288 = scalar_select %p287, %s21, 0
      %s289 = sadd.s32 %s288, %s286
      %s290 = smul.addr %s289, 4
      %s291 = scalar_lea.vmem %s1, %s290
      %s292 = smul.u32 19, %s22
      %p293 = scmp.lt.s32.totalorder %s21, 0
      %s294 = scalar_select %p293, %s21, 0
      %s295 = scalar_lea.vmem %s2, %s294
      %p296 = scmp.lt.s32.totalorder %s21, 0
      %s297 = scalar_select %p296, %s21, 0
      %s298 = scalar_lea.vmem %s3, %s297
      %s299 = smul.u32 32, %s20
      %p300 = scmp.lt.s32.totalorder %s299, 255
      %s301 = scalar_select %p300, %s299, 255
      %p302 = scmp.lt.s32.totalorder %s21, 0
      %s303 = scalar_select %p302, %s21, 0
      %s304 = sadd.s32 %s303, %s301
      %s305 = smul.addr %s304, 4
      %s306 = scalar_lea.vmem %s4, %s305
      %s307 = smul.u32 32, %s20
      %p309 = scmp.eq.s32.totalorder %s22, 0
      // Predicated region
      $region37: #{tpu_custom_call.1} parent=35 // pred_check
        %p310 = pneg %p309
      $region38: #{tpu_custom_call.1} parent=35 // pred_check_branch
        %312 = sbr.rel (%p310) target = $region40
      $region39: #{tpu_custom_call.1} parent=35 // pred_region
        %vm313 = vcmask 523264
        %314 = vst.msk [vmem:[#allocation2] sm:$0xff] %vm313, 0.0
        %315 = vst.msk [vmem:[#allocation2 + $0x8] sm:$0xff] %vm313, 0.0
        %316 = vst.msk [vmem:[#allocation2 + $0x10] sm:$0xff] %vm313, 0.0
        %317 = vst.msk [vmem:[#allocation2 + $0x18] sm:$0xff] %vm313, 0.0
        %318 = vst.msk [vmem:[#allocation2 + $0x20] sm:$0xff] %vm313, 0.0
        %319 = vst.msk [vmem:[#allocation2 + $0x28] sm:$0xff] %vm313, 0.0
        %320 = vst.msk [vmem:[#allocation2 + $0x30] sm:$0xff] %vm313, 0.0
        %321 = vst.msk [vmem:[#allocation2 + $0x38] sm:$0xff] %vm313, 0.0
        %322 = vst.msk [vmem:[#allocation2 + $0x40] sm:$0xff] %vm313, 0.0
        %323 = vst.msk [vmem:[#allocation2 + $0x48] sm:$0xff] %vm313, 0.0
        %324 = vst.msk [vmem:[#allocation2 + $0x50] sm:$0xff] %vm313, 0.0
        %325 = vst.msk [vmem:[#allocation2 + $0x58] sm:$0xff] %vm313, 0.0
        %326 = vst.msk [vmem:[#allocation2 + $0x60] sm:$0xff] %vm313, 0.0
        %327 = vst.msk [vmem:[#allocation2 + $0x68] sm:$0xff] %vm313, 0.0
        %328 = vst.msk [vmem:[#allocation2 + $0x70] sm:$0xff] %vm313, 0.0
        %329 = vst.msk [vmem:[#allocation2 + $0x78] sm:$0xff] %vm313, 0.0
        %330 = vst.msk [vmem:[#allocation2 + $0x80] sm:$0xff] %vm313, 0.0
        %331 = vst.msk [vmem:[#allocation2 + $0x88] sm:$0xff] %vm313, 0.0
        %332 = vst.msk [vmem:[#allocation2 + $0x90] sm:$0xff] %vm313, 0.0
        %333 = vst.msk [vmem:[#allocation2 + $0x98] sm:$0xff] %vm313, 0.0
        %334 = vst.msk [vmem:[#allocation2 + $0xa0] sm:$0xff] %vm313, 0.0
        %335 = vst.msk [vmem:[#allocation2 + $0xa8] sm:$0xff] %vm313, 0.0
        %336 = vst.msk [vmem:[#allocation2 + $0xb0] sm:$0xff] %vm313, 0.0
        %337 = vst.msk [vmem:[#allocation2 + $0xb8] sm:$0xff] %vm313, 0.0
        %338 = vst.msk [vmem:[#allocation2 + $0xc0] sm:$0xff] %vm313, 0.0
        %339 = vst.msk [vmem:[#allocation2 + $0xc8] sm:$0xff] %vm313, 0.0
        %340 = vst.msk [vmem:[#allocation2 + $0xd0] sm:$0xff] %vm313, 0.0
        %341 = vst.msk [vmem:[#allocation2 + $0xd8] sm:$0xff] %vm313, 0.0
        %342 = vst.msk [vmem:[#allocation2 + $0xe0] sm:$0xff] %vm313, 0.0
        %343 = vst.msk [vmem:[#allocation2 + $0xe8] sm:$0xff] %vm313, 0.0
        %344 = vst.msk [vmem:[#allocation2 + $0xf0] sm:$0xff] %vm313, 0.0
        %345 = vst.msk [vmem:[#allocation2 + $0xf8] sm:$0xff] %vm313, 0.0
      $region40: #{tpu_custom_call.1} parent=35 // pred_fallthru
        _
      %v346 = vld [vmem:[#allocation2] sm:$0xff]
      %v347 = vld [vmem:[#allocation2 + $0x8] sm:$0xff]
      %v348 = vld [vmem:[#allocation2 + $0x10] sm:$0xff]
      %v349 = vld [vmem:[#allocation2 + $0x18] sm:$0xff]
      %v350 = vld [vmem:[#allocation2 + $0x20] sm:$0xff]
      %v351 = vld [vmem:[#allocation2 + $0x28] sm:$0xff]
      %v352 = vld [vmem:[#allocation2 + $0x30] sm:$0xff]
      %v353 = vld [vmem:[#allocation2 + $0x38] sm:$0xff]
      %v354 = vld [vmem:[#allocation2 + $0x40] sm:$0xff]
      %v355 = vld [vmem:[#allocation2 + $0x48] sm:$0xff]
      %v356 = vld [vmem:[#allocation2 + $0x50] sm:$0xff]
      %v357 = vld [vmem:[#allocation2 + $0x58] sm:$0xff]
      %v358 = vld [vmem:[#allocation2 + $0x60] sm:$0xff]
      %v359 = vld [vmem:[#allocation2 + $0x68] sm:$0xff]
      %v360 = vld [vmem:[#allocation2 + $0x70] sm:$0xff]
      %v361 = vld [vmem:[#allocation2 + $0x78] sm:$0xff]
      %v362 = vld [vmem:[#allocation2 + $0x80] sm:$0xff]
      %v363 = vld [vmem:[#allocation2 + $0x88] sm:$0xff]
      %v364 = vld [vmem:[#allocation2 + $0x90] sm:$0xff]
      %v365 = vld [vmem:[#allocation2 + $0x98] sm:$0xff]
      %v366 = vld [vmem:[#allocation2 + $0xa0] sm:$0xff]
      %v367 = vld [vmem:[#allocation2 + $0xa8] sm:$0xff]
      %v368 = vld [vmem:[#allocation2 + $0xb0] sm:$0xff]
      %v369 = vld [vmem:[#allocation2 + $0xb8] sm:$0xff]
      %v370 = vld [vmem:[#allocation2 + $0xc0] sm:$0xff]
      %v371 = vld [vmem:[#allocation2 + $0xc8] sm:$0xff]
      %v372 = vld [vmem:[#allocation2 + $0xd0] sm:$0xff]
      %v373 = vld [vmem:[#allocation2 + $0xd8] sm:$0xff]
      %v374 = vld [vmem:[#allocation2 + $0xe0] sm:$0xff]
      %v375 = vld [vmem:[#allocation2 + $0xe8] sm:$0xff]
      %v376 = vld [vmem:[#allocation2 + $0xf0] sm:$0xff]
      %v377 = vld [vmem:[#allocation2 + $0xf8] sm:$0xff]
      %v378 = vld [vmem:[%s281] sm:$0xff]
      %v379 = vld [vmem:[%s281 + $0x8] sm:$0xff]
      %v380 = vld [vmem:[%s281 + $0x10] sm:$0xff]
      %v381 = vld [vmem:[%s281 + $0x18] sm:$0xff]
      %v382 = vld [vmem:[%s281 + $0x20] sm:$0xff]
      %v383 = vld [vmem:[%s281 + $0x28] sm:$0xff]
      %v384 = vld [vmem:[%s281 + $0x30] sm:$0xff]
      %v385 = vld [vmem:[%s281 + $0x38] sm:$0xff]
      %v386 = vld [vmem:[%s281 + $0x40] sm:$0xff]
      %v387 = vld [vmem:[%s281 + $0x48] sm:$0xff]
      %v388 = vld [vmem:[%s281 + $0x50] sm:$0xff]
      %v389 = vld [vmem:[%s281 + $0x58] sm:$0xff]
      %v390 = vld [vmem:[%s281 + $0x60] sm:$0xff]
      %v391 = vld [vmem:[%s281 + $0x68] sm:$0xff]
      %v392 = vld [vmem:[%s281 + $0x70] sm:$0xff]
      %v393 = vld [vmem:[%s281 + $0x78] sm:$0xff]
      %v394 = vld [vmem:[%s281 + $0x80] sm:$0xff]
      %v395 = vld [vmem:[%s281 + $0x88] sm:$0xff]
      %v396 = vld [vmem:[%s281 + $0x90] sm:$0xff]
      %v397 = vld [vmem:[%s281 + $0x98] sm:$0xff]
      %v398 = vld [vmem:[%s281 + $0xa0] sm:$0xff]
      %v399 = vld [vmem:[%s281 + $0xa8] sm:$0xff]
      %v400 = vld [vmem:[%s281 + $0xb0] sm:$0xff]
      %v401 = vld [vmem:[%s281 + $0xb8] sm:$0xff]
      %v402 = vld [vmem:[%s281 + $0xc0] sm:$0xff]
      %v403 = vld [vmem:[%s281 + $0xc8] sm:$0xff]
      %v404 = vld [vmem:[%s281 + $0xd0] sm:$0xff]
      %v405 = vld [vmem:[%s281 + $0xd8] sm:$0xff]
      %v406 = vld [vmem:[%s281 + $0xe0] sm:$0xff]
      %v407 = vld [vmem:[%s281 + $0xe8] sm:$0xff]
      %v408 = vld [vmem:[%s281 + $0xf0] sm:$0xff]
      %v409 = vld [vmem:[%s281 + $0xf8] sm:$0xff]
      %v410 = vld [vmem:[%s291] sm:$0xf]
      %v411 = vld [vmem:[%s291 + $0x4] sm:$0xf]
      %v412 = vld [vmem:[%s291 + $0x8] sm:$0xf]
      %v413 = vld [vmem:[%s291 + $0xc] sm:$0xf]
      %v414 = vld [vmem:[%s291 + $0x10] sm:$0xf]
      %v415 = vld [vmem:[%s291 + $0x14] sm:$0xf]
      %v416 = vld [vmem:[%s291 + $0x18] sm:$0xf]
      %v417 = vld [vmem:[%s291 + $0x1c] sm:$0xf]
      %v418 = vld [vmem:[%s291 + $0x20] sm:$0xf]
      %v419 = vld [vmem:[%s291 + $0x24] sm:$0xf]
      %v420 = vld [vmem:[%s291 + $0x28] sm:$0xf]
      %v421 = vld [vmem:[%s291 + $0x2c] sm:$0xf]
      %v422 = vld [vmem:[%s291 + $0x30] sm:$0xf]
      %v423 = vld [vmem:[%s291 + $0x34] sm:$0xf]
      %v424 = vld [vmem:[%s291 + $0x38] sm:$0xf]
      %v425 = vld [vmem:[%s291 + $0x3c] sm:$0xf]
      %v426 = vld [vmem:[%s291 + $0x40] sm:$0xf]
      %v427 = vld [vmem:[%s291 + $0x44] sm:$0xf]
      %v428 = vld [vmem:[%s291 + $0x48] sm:$0x3]
      %v461 = vunpack.c.l.b16 %v378
      %v462 = vunpack.c.h.b16 %v378
      %v463 = vunpack.c.l.b16 %v379
      %v464 = vunpack.c.h.b16 %v379
      %v465 = vunpack.c.l.b16 %v380
      %v466 = vunpack.c.h.b16 %v380
      %v467 = vunpack.c.l.b16 %v381
      %v468 = vunpack.c.h.b16 %v381
      %v469 = vunpack.c.l.b16 %v382
      %v470 = vunpack.c.h.b16 %v382
      %v471 = vunpack.c.l.b16 %v383
      %v472 = vunpack.c.h.b16 %v383
      %v473 = vunpack.c.l.b16 %v384
      %v474 = vunpack.c.h.b16 %v384
      %v475 = vunpack.c.l.b16 %v385
      %v476 = vunpack.c.h.b16 %v385
      %v477 = vunpack.c.l.b16 %v386
      %v478 = vunpack.c.h.b16 %v386
      %v479 = vunpack.c.l.b16 %v387
      %v480 = vunpack.c.h.b16 %v387
      %v481 = vunpack.c.l.b16 %v388
      %v482 = vunpack.c.h.b16 %v388
      %v483 = vunpack.c.l.b16 %v389
      %v484 = vunpack.c.h.b16 %v389
      %v485 = vunpack.c.l.b16 %v390
      %v486 = vunpack.c.h.b16 %v390
      %v487 = vunpack.c.l.b16 %v391
      %v488 = vunpack.c.h.b16 %v391
      %v489 = vunpack.c.l.b16 %v392
      %v490 = vunpack.c.h.b16 %v392
      %v491 = vunpack.c.l.b16 %v393
      %v492 = vunpack.c.h.b16 %v393
      %v493 = vunpack.c.l.b16 %v394
      %v494 = vunpack.c.h.b16 %v394
      %v495 = vunpack.c.l.b16 %v395
      %v496 = vunpack.c.h.b16 %v395
      %v497 = vunpack.c.l.b16 %v396
      %v498 = vunpack.c.h.b16 %v396
      %v499 = vunpack.c.l.b16 %v397
      %v500 = vunpack.c.h.b16 %v397
      %v501 = vunpack.c.l.b16 %v398
      %v502 = vunpack.c.h.b16 %v398
      %v503 = vunpack.c.l.b16 %v399
      %v504 = vunpack.c.h.b16 %v399
      %v505 = vunpack.c.l.b16 %v400
      %v506 = vunpack.c.h.b16 %v400
      %v507 = vunpack.c.l.b16 %v401
      %v508 = vunpack.c.h.b16 %v401
      %v509 = vunpack.c.l.b16 %v402
      %v510 = vunpack.c.h.b16 %v402
      %v511 = vunpack.c.l.b16 %v403
      %v512 = vunpack.c.h.b16 %v403
      %v513 = vunpack.c.l.b16 %v404
      %v514 = vunpack.c.h.b16 %v404
      %v515 = vunpack.c.l.b16 %v405
      %v516 = vunpack.c.h.b16 %v405
      %v517 = vunpack.c.l.b16 %v406
      %v518 = vunpack.c.h.b16 %v406
      %v519 = vunpack.c.l.b16 %v407
      %v520 = vunpack.c.h.b16 %v407
      %v521 = vunpack.c.l.b16 %v408
      %v522 = vunpack.c.h.b16 %v408
      %v523 = vunpack.c.l.b16 %v409
      %v524 = vunpack.c.h.b16 %v409
      %v525 = vpack.c.b16 %v463, %v461
      %v526 = vpack.c.b16 %v464, %v462
      %v527 = vpack.c.b16 %v467, %v465
      %v528 = vpack.c.b16 %v468, %v466
      %v529 = vpack.c.b16 %v471, %v469
      %v530 = vpack.c.b16 %v472, %v470
      %v531 = vpack.c.b16 %v475, %v473
      %v532 = vpack.c.b16 %v476, %v474
      %v533 = vpack.c.b16 %v479, %v477
      %v534 = vpack.c.b16 %v480, %v478
      %v535 = vpack.c.b16 %v483, %v481
      %v536 = vpack.c.b16 %v484, %v482
      %v537 = vpack.c.b16 %v487, %v485
      %v538 = vpack.c.b16 %v488, %v486
      %v539 = vpack.c.b16 %v491, %v489
      %v540 = vpack.c.b16 %v492, %v490
      %v541 = vpack.c.b16 %v495, %v493
      %v542 = vpack.c.b16 %v496, %v494
      %v543 = vpack.c.b16 %v499, %v497
      %v544 = vpack.c.b16 %v500, %v498
      %v545 = vpack.c.b16 %v503, %v501
      %v546 = vpack.c.b16 %v504, %v502
      %v547 = vpack.c.b16 %v507, %v505
      %v548 = vpack.c.b16 %v508, %v506
      %v549 = vpack.c.b16 %v511, %v509
      %v550 = vpack.c.b16 %v512, %v510
      %v551 = vpack.c.b16 %v515, %v513
      %v552 = vpack.c.b16 %v516, %v514
      %v553 = vpack.c.b16 %v519, %v517
      %v554 = vpack.c.b16 %v520, %v518
      %v555 = vpack.c.b16 %v523, %v521
      %v556 = vpack.c.b16 %v524, %v522
      %v592 = vunpack.c.l.b16 %v410
      %v593 = vunpack.c.l.b16 %v411
      %v594 = vunpack.c.l.b16 %v412
      %v595 = vunpack.c.l.b16 %v413
      %v596 = vunpack.c.l.b16 %v414
      %v597 = vunpack.c.l.b16 %v415
      %v598 = vunpack.c.l.b16 %v416
      %v599 = vunpack.c.l.b16 %v417
      %v600 = vunpack.c.l.b16 %v418
      %v601 = vunpack.c.l.b16 %v419
      %v602 = vunpack.c.l.b16 %v420
      %v603 = vunpack.c.l.b16 %v421
      %v604 = vunpack.c.l.b16 %v422
      %v605 = vunpack.c.l.b16 %v423
      %v606 = vunpack.c.l.b16 %v424
      %v607 = vunpack.c.l.b16 %v425
      %v608 = vunpack.c.l.b16 %v426
      %v609 = vunpack.c.l.b16 %v427
      %v610 = vunpack.c.l.b16 %v428
      %v611 = vpack.c.b16 %v593, %v592
      %v612 = vpack.c.b16 %v595, %v594
      %v613 = vpack.c.b16 %v597, %v596
      %v614 = vpack.c.b16 %v599, %v598
      %v615 = vpack.c.b16 %v601, %v600
      %v616 = vpack.c.b16 %v603, %v602
      %v617 = vpack.c.b16 %v605, %v604
      %v618 = vpack.c.b16 %v607, %v606
      %v619 = vpack.c.b16 %v609, %v608
      %v620 = vpack.c.b16 %v610, %v610
      %vm630 = vcmask 154624
      %v632 = vsel %vm630, %v526, 0
      %v635 = vsel %vm630, %v528, 0
      %v638 = vsel %vm630, %v530, 0
      %v641 = vsel %vm630, %v532, 0
      %v644 = vsel %vm630, %v534, 0
      %v647 = vsel %vm630, %v536, 0
      %v650 = vsel %vm630, %v538, 0
      %v653 = vsel %vm630, %v540, 0
      %v656 = vsel %vm630, %v542, 0
      %v659 = vsel %vm630, %v544, 0
      %v662 = vsel %vm630, %v546, 0
      %v665 = vsel %vm630, %v548, 0
      %v668 = vsel %vm630, %v550, 0
      %v671 = vsel %vm630, %v552, 0
      %v674 = vsel %vm630, %v554, 0
      %v677 = vsel %vm630, %v556, 0
      %vm679 = vcmask 1040384
      %vm680 = vcmask 1041408
      %v681 = vsel %vm679, 4294967295, 65535
      %v682 = vsel %vm680, %v681, 0
      %v684 = vand.u32 %v620, %v682
      %686 = vmatpush.bf16.msra.mxu0 %v618
      %687 = vmatpush.bf16.msra.mxu0 %v617
      %688 = vmatpush.bf16.msra.mxu0 %v616
      %689 = vmatpush.bf16.msra.mxu0 %v615
      %690 = vmatpush.bf16.msra.mxu0 %v614
      %691 = vmatpush.bf16.msra.mxu0 %v613
      %692 = vmatpush.bf16.msra.mxu0 %v612
      %693 = vmatpush.bf16.msra.mxu0 %v611
      %694 = vmatmul.bf16.gmra.mxu0 %v525
      %v695 = vpop.f32.mrf.mxu0
      %v696 = vadd.f32 0.0, %v695
      %v697 = vpop.f32.mrf.mxu0
      %v698 = vadd.f32 0.0, %v697
      %699 = vmatmul.bf16.gmra.mxu0 %v527
      %v700 = vpop.f32.mrf.mxu0
      %v701 = vadd.f32 0.0, %v700
      %v702 = vpop.f32.mrf.mxu0
      %v703 = vadd.f32 0.0, %v702
      %704 = vmatmul.bf16.gmra.mxu0 %v529
      %v705 = vpop.f32.mrf.mxu0
      %v706 = vadd.f32 0.0, %v705
      %v707 = vpop.f32.mrf.mxu0
      %v708 = vadd.f32 0.0, %v707
      %709 = vmatmul.bf16.gmra.mxu0 %v531
      %v710 = vpop.f32.mrf.mxu0
      %v711 = vadd.f32 0.0, %v710
      %v712 = vpop.f32.mrf.mxu0
      %v713 = vadd.f32 0.0, %v712
      %714 = vmatmul.bf16.gmra.mxu0 %v533
      %v715 = vpop.f32.mrf.mxu0
      %v716 = vadd.f32 0.0, %v715
      %v717 = vpop.f32.mrf.mxu0
      %v718 = vadd.f32 0.0, %v717
      %719 = vmatmul.bf16.gmra.mxu0 %v535
      %v720 = vpop.f32.mrf.mxu0
      %v721 = vadd.f32 0.0, %v720
      %v722 = vpop.f32.mrf.mxu0
      %v723 = vadd.f32 0.0, %v722
      %724 = vmatmul.bf16.gmra.mxu0 %v537
      %v725 = vpop.f32.mrf.mxu0
      %v726 = vadd.f32 0.0, %v725
      %v727 = vpop.f32.mrf.mxu0
      %v728 = vadd.f32 0.0, %v727
      %729 = vmatmul.bf16.gmra.mxu0 %v539
      %v730 = vpop.f32.mrf.mxu0
      %v731 = vadd.f32 0.0, %v730
      %v732 = vpop.f32.mrf.mxu0
      %v733 = vadd.f32 0.0, %v732
      %734 = vmatmul.bf16.gmra.mxu0 %v541
      %v735 = vpop.f32.mrf.mxu0
      %v736 = vadd.f32 0.0, %v735
      %v737 = vpop.f32.mrf.mxu0
      %v738 = vadd.f32 0.0, %v737
      %739 = vmatmul.bf16.gmra.mxu0 %v543
      %v740 = vpop.f32.mrf.mxu0
      %v741 = vadd.f32 0.0, %v740
      %v742 = vpop.f32.mrf.mxu0
      %v743 = vadd.f32 0.0, %v742
      %744 = vmatmul.bf16.gmra.mxu0 %v545
      %v745 = vpop.f32.mrf.mxu0
      %v746 = vadd.f32 0.0, %v745
      %v747 = vpop.f32.mrf.mxu0
      %v748 = vadd.f32 0.0, %v747
      %749 = vmatmul.bf16.gmra.mxu0 %v547
      %v750 = vpop.f32.mrf.mxu0
      %v751 = vadd.f32 0.0, %v750
      %v752 = vpop.f32.mrf.mxu0
      %v753 = vadd.f32 0.0, %v752
      %754 = vmatmul.bf16.gmra.mxu0 %v549
      %v755 = vpop.f32.mrf.mxu0
      %v756 = vadd.f32 0.0, %v755
      %v757 = vpop.f32.mrf.mxu0
      %v758 = vadd.f32 0.0, %v757
      %759 = vmatmul.bf16.gmra.mxu0 %v551
      %v760 = vpop.f32.mrf.mxu0
      %v761 = vadd.f32 0.0, %v760
      %v762 = vpop.f32.mrf.mxu0
      %v763 = vadd.f32 0.0, %v762
      %764 = vmatmul.bf16.gmra.mxu0 %v553
      %v765 = vpop.f32.mrf.mxu0
      %v766 = vadd.f32 0.0, %v765
      %v767 = vpop.f32.mrf.mxu0
      %v768 = vadd.f32 0.0, %v767
      %769 = vmatmul.bf16.gmra.mxu0 %v555
      %v770 = vpop.f32.mrf.mxu0
      %v771 = vadd.f32 0.0, %v770
      %v772 = vpop.f32.mrf.mxu0
      %v773 = vadd.f32 0.0, %v772
      %774 = vdwg.mxu0
      %775 = vmatpush.bf16.msra.mxu0 0
      %776 = vmatpush.bf16.msra.mxu0 0
      %777 = vmatpush.bf16.msra.mxu0 0
      %778 = vmatpush.bf16.msra.mxu0 0
      %779 = vmatpush.bf16.msra.mxu0 0
      %780 = vmatpush.bf16.msra.mxu0 0
      %781 = vmatpush.bf16.msra.mxu0 %v684
      %782 = vmatpush.bf16.msra.mxu0 %v619
      %783 = vmatmul.bf16.gmra.mxu0 %v632
      %v784 = vpop.f32.mrf.mxu0
      %v785 = vadd.f32 %v696, %v784
      %v786 = vpop.f32.mrf.mxu0
      %v787 = vadd.f32 %v698, %v786
      %788 = vmatmul.bf16.gmra.mxu0 %v635
      %v789 = vpop.f32.mrf.mxu0
      %v790 = vadd.f32 %v701, %v789
      %v791 = vpop.f32.mrf.mxu0
      %v792 = vadd.f32 %v703, %v791
      %793 = vmatmul.bf16.gmra.mxu0 %v638
      %v794 = vpop.f32.mrf.mxu0
      %v795 = vadd.f32 %v706, %v794
      %v796 = vpop.f32.mrf.mxu0
      %v797 = vadd.f32 %v708, %v796
      %798 = vmatmul.bf16.gmra.mxu0 %v641
      %v799 = vpop.f32.mrf.mxu0
      %v800 = vadd.f32 %v711, %v799
      %v801 = vpop.f32.mrf.mxu0
      %v802 = vadd.f32 %v713, %v801
      %803 = vmatmul.bf16.gmra.mxu0 %v644
      %v804 = vpop.f32.mrf.mxu0
      %v805 = vadd.f32 %v716, %v804
      %v806 = vpop.f32.mrf.mxu0
      %v807 = vadd.f32 %v718, %v806
      %808 = vmatmul.bf16.gmra.mxu0 %v647
      %v809 = vpop.f32.mrf.mxu0
      %v810 = vadd.f32 %v721, %v809
      %v811 = vpop.f32.mrf.mxu0
      %v812 = vadd.f32 %v723, %v811
      %813 = vmatmul.bf16.gmra.mxu0 %v650
      %v814 = vpop.f32.mrf.mxu0
      %v815 = vadd.f32 %v726, %v814
      %v816 = vpop.f32.mrf.mxu0
      %v817 = vadd.f32 %v728, %v816
      %818 = vmatmul.bf16.gmra.mxu0 %v653
      %v819 = vpop.f32.mrf.mxu0
      %v820 = vadd.f32 %v731, %v819
      %v821 = vpop.f32.mrf.mxu0
      %v822 = vadd.f32 %v733, %v821
      %823 = vmatmul.bf16.gmra.mxu0 %v656
      %v824 = vpop.f32.mrf.mxu0
      %v825 = vadd.f32 %v736, %v824
      %v826 = vpop.f32.mrf.mxu0
      %v827 = vadd.f32 %v738, %v826
      %828 = vmatmul.bf16.gmra.mxu0 %v659
      %v829 = vpop.f32.mrf.mxu0
      %v830 = vadd.f32 %v741, %v829
      %v831 = vpop.f32.mrf.mxu0
      %v832 = vadd.f32 %v743, %v831
      %833 = vmatmul.bf16.gmra.mxu0 %v662
      %v834 = vpop.f32.mrf.mxu0
      %v835 = vadd.f32 %v746, %v834
      %v836 = vpop.f32.mrf.mxu0
      %v837 = vadd.f32 %v748, %v836
      %838 = vmatmul.bf16.gmra.mxu0 %v665
      %v839 = vpop.f32.mrf.mxu0
      %v840 = vadd.f32 %v751, %v839
      %v841 = vpop.f32.mrf.mxu0
      %v842 = vadd.f32 %v753, %v841
      %843 = vmatmul.bf16.gmra.mxu0 %v668
      %v844 = vpop.f32.mrf.mxu0
      %v845 = vadd.f32 %v756, %v844
      %v846 = vpop.f32.mrf.mxu0
      %v847 = vadd.f32 %v758, %v846
      %848 = vmatmul.bf16.gmra.mxu0 %v671
      %v849 = vpop.f32.mrf.mxu0
      %v850 = vadd.f32 %v761, %v849
      %v851 = vpop.f32.mrf.mxu0
      %v852 = vadd.f32 %v763, %v851
      %853 = vmatmul.bf16.gmra.mxu0 %v674
      %v854 = vpop.f32.mrf.mxu0
      %v855 = vadd.f32 %v766, %v854
      %v856 = vpop.f32.mrf.mxu0
      %v857 = vadd.f32 %v768, %v856
      %858 = vmatmul.bf16.gmra.mxu0 %v677
      %v859 = vpop.f32.mrf.mxu0
      %v860 = vadd.f32 %v771, %v859
      %v861 = vpop.f32.mrf.mxu0
      %v862 = vadd.f32 %v773, %v861
      %863 = vdwg.mxu0
      %v864 = vadd.f32 %v346, %v785
      %v865 = vadd.f32 %v347, %v787
      %v866 = vadd.f32 %v348, %v790
      %v867 = vadd.f32 %v349, %v792
      %v868 = vadd.f32 %v350, %v795
      %v869 = vadd.f32 %v351, %v797
      %v870 = vadd.f32 %v352, %v800
      %v871 = vadd.f32 %v353, %v802
      %v872 = vadd.f32 %v354, %v805
      %v873 = vadd.f32 %v355, %v807
      %v874 = vadd.f32 %v356, %v810
      %v875 = vadd.f32 %v357, %v812
      %v876 = vadd.f32 %v358, %v815
      %v877 = vadd.f32 %v359, %v817
      %v878 = vadd.f32 %v360, %v820
      %v879 = vadd.f32 %v361, %v822
      %v880 = vadd.f32 %v362, %v825
      %v881 = vadd.f32 %v363, %v827
      %v882 = vadd.f32 %v364, %v830
      %v883 = vadd.f32 %v365, %v832
      %v884 = vadd.f32 %v366, %v835
      %v885 = vadd.f32 %v367, %v837
      %v886 = vadd.f32 %v368, %v840
      %v887 = vadd.f32 %v369, %v842
      %v888 = vadd.f32 %v370, %v845
      %v889 = vadd.f32 %v371, %v847
      %v890 = vadd.f32 %v372, %v850
      %v891 = vadd.f32 %v373, %v852
      %v892 = vadd.f32 %v374, %v855
      %v893 = vadd.f32 %v375, %v857
      %v894 = vadd.f32 %v376, %v860
      %v895 = vadd.f32 %v377, %v862
      %vm896 = vcmask 523264
      %897 = vst.msk [vmem:[#allocation2] sm:$0xff] %vm896, %v864
      %898 = vst.msk [vmem:[#allocation2 + $0x8] sm:$0xff] %vm896, %v865
      %899 = vst.msk [vmem:[#allocation2 + $0x10] sm:$0xff] %vm896, %v866
      %900 = vst.msk [vmem:[#allocation2 + $0x18] sm:$0xff] %vm896, %v867
      %901 = vst.msk [vmem:[#allocation2 + $0x20] sm:$0xff] %vm896, %v868
      %902 = vst.msk [vmem:[#allocation2 + $0x28] sm:$0xff] %vm896, %v869
      %903 = vst.msk [vmem:[#allocation2 + $0x30] sm:$0xff] %vm896, %v870
      %904 = vst.msk [vmem:[#allocation2 + $0x38] sm:$0xff] %vm896, %v871
      %905 = vst.msk [vmem:[#allocation2 + $0x40] sm:$0xff] %vm896, %v872
      %906 = vst.msk [vmem:[#allocation2 + $0x48] sm:$0xff] %vm896, %v873
      %907 = vst.msk [vmem:[#allocation2 + $0x50] sm:$0xff] %vm896, %v874
      %908 = vst.msk [vmem:[#allocation2 + $0x58] sm:$0xff] %vm896, %v875
      %909 = vst.msk [vmem:[#allocation2 + $0x60] sm:$0xff] %vm896, %v876
      %910 = vst.msk [vmem:[#allocation2 + $0x68] sm:$0xff] %vm896, %v877
      %911 = vst.msk [vmem:[#allocation2 + $0x70] sm:$0xff] %vm896, %v878
      %912 = vst.msk [vmem:[#allocation2 + $0x78] sm:$0xff] %vm896, %v879
      %913 = vst.msk [vmem:[#allocation2 + $0x80] sm:$0xff] %vm896, %v880
      %914 = vst.msk [vmem:[#allocation2 + $0x88] sm:$0xff] %vm896, %v881
      %915 = vst.msk [vmem:[#allocation2 + $0x90] sm:$0xff] %vm896, %v882
      %916 = vst.msk [vmem:[#allocation2 + $0x98] sm:$0xff] %vm896, %v883
      %917 = vst.msk [vmem:[#allocation2 + $0xa0] sm:$0xff] %vm896, %v884
      %918 = vst.msk [vmem:[#allocation2 + $0xa8] sm:$0xff] %vm896, %v885
      %919 = vst.msk [vmem:[#allocation2 + $0xb0] sm:$0xff] %vm896, %v886
      %920 = vst.msk [vmem:[#allocation2 + $0xb8] sm:$0xff] %vm896, %v887
      %921 = vst.msk [vmem:[#allocation2 + $0xc0] sm:$0xff] %vm896, %v888
      %922 = vst.msk [vmem:[#allocation2 + $0xc8] sm:$0xff] %vm896, %v889
      %923 = vst.msk [vmem:[#allocation2 + $0xd0] sm:$0xff] %vm896, %v890
      %924 = vst.msk [vmem:[#allocation2 + $0xd8] sm:$0xff] %vm896, %v891
      %925 = vst.msk [vmem:[#allocation2 + $0xe0] sm:$0xff] %vm896, %v892
      %926 = vst.msk [vmem:[#allocation2 + $0xe8] sm:$0xff] %vm896, %v893
      %927 = vst.msk [vmem:[#allocation2 + $0xf0] sm:$0xff] %vm896, %v894
      %928 = vst.msk [vmem:[#allocation2 + $0xf8] sm:$0xff] %vm896, %v895
      // Predicated region
      $region41: #{tpu_custom_call.1} parent=35 // pred_check
        %p929 = pneg %p309
      $region42: #{tpu_custom_call.1} parent=35 // pred_check_branch
        %931 = sbr.rel (%p929) target = $region44
      $region43: #{tpu_custom_call.1} parent=35 // pred_region
        %v932 = vld [vmem:[#allocation2] sm:$0xff]
        %v933 = vld [vmem:[#allocation2 + $0x8] sm:$0xff]
        %v934 = vld [vmem:[#allocation2 + $0x10] sm:$0xff]
        %v935 = vld [vmem:[#allocation2 + $0x18] sm:$0xff]
        %v936 = vld [vmem:[#allocation2 + $0x20] sm:$0xff]
        %v937 = vld [vmem:[#allocation2 + $0x28] sm:$0xff]
        %v938 = vld [vmem:[#allocation2 + $0x30] sm:$0xff]
        %v939 = vld [vmem:[#allocation2 + $0x38] sm:$0xff]
        %v940 = vld [vmem:[#allocation2 + $0x40] sm:$0xff]
        %v941 = vld [vmem:[#allocation2 + $0x48] sm:$0xff]
        %v942 = vld [vmem:[#allocation2 + $0x50] sm:$0xff]
        %v943 = vld [vmem:[#allocation2 + $0x58] sm:$0xff]
        %v944 = vld [vmem:[#allocation2 + $0x60] sm:$0xff]
        %v945 = vld [vmem:[#allocation2 + $0x68] sm:$0xff]
        %v946 = vld [vmem:[#allocation2 + $0x70] sm:$0xff]
        %v947 = vld [vmem:[#allocation2 + $0x78] sm:$0xff]
        %v948 = vld [vmem:[#allocation2 + $0x80] sm:$0xff]
        %v949 = vld [vmem:[#allocation2 + $0x88] sm:$0xff]
        %v950 = vld [vmem:[#allocation2 + $0x90] sm:$0xff]
        %v951 = vld [vmem:[#allocation2 + $0x98] sm:$0xff]
        %v952 = vld [vmem:[#allocation2 + $0xa0] sm:$0xff]
        %v953 = vld [vmem:[#allocation2 + $0xa8] sm:$0xff]
        %v954 = vld [vmem:[#allocation2 + $0xb0] sm:$0xff]
        %v955 = vld [vmem:[#allocation2 + $0xb8] sm:$0xff]
        %v956 = vld [vmem:[#allocation2 + $0xc0] sm:$0xff]
        %v957 = vld [vmem:[#allocation2 + $0xc8] sm:$0xff]
        %v958 = vld [vmem:[#allocation2 + $0xd0] sm:$0xff]
        %v959 = vld [vmem:[#allocation2 + $0xd8] sm:$0xff]
        %v960 = vld [vmem:[#allocation2 + $0xe0] sm:$0xff]
        %v961 = vld [vmem:[#allocation2 + $0xe8] sm:$0xff]
        %v962 = vld [vmem:[#allocation2 + $0xf0] sm:$0xff]
        %v963 = vld [vmem:[#allocation2 + $0xf8] sm:$0xff]
        %v964 = vld [vmem:[%s295] sm:$0x1]
        %v966 = vperm.slane %v964, 0
        %v968 = vmul.f32 %v932, %v966
        %v969 = vmul.f32 %v933, %v966
        %v970 = vmul.f32 %v934, %v966
        %v971 = vmul.f32 %v935, %v966
        %v972 = vmul.f32 %v936, %v966
        %v973 = vmul.f32 %v937, %v966
        %v974 = vmul.f32 %v938, %v966
        %v975 = vmul.f32 %v939, %v966
        %v976 = vmul.f32 %v940, %v966
        %v977 = vmul.f32 %v941, %v966
        %v978 = vmul.f32 %v942, %v966
        %v979 = vmul.f32 %v943, %v966
        %v980 = vmul.f32 %v944, %v966
        %v981 = vmul.f32 %v945, %v966
        %v982 = vmul.f32 %v946, %v966
        %v983 = vmul.f32 %v947, %v966
        %v984 = vmul.f32 %v948, %v966
        %v985 = vmul.f32 %v949, %v966
        %v986 = vmul.f32 %v950, %v966
        %v987 = vmul.f32 %v951, %v966
        %v988 = vmul.f32 %v952, %v966
        %v989 = vmul.f32 %v953, %v966
        %v990 = vmul.f32 %v954, %v966
        %v991 = vmul.f32 %v955, %v966
        %v992 = vmul.f32 %v956, %v966
        %v993 = vmul.f32 %v957, %v966
        %v994 = vmul.f32 %v958, %v966
        %v995 = vmul.f32 %v959, %v966
        %v996 = vmul.f32 %v960, %v966
        %v997 = vmul.f32 %v961, %v966
        %v998 = vmul.f32 %v962, %v966
        %v999 = vmul.f32 %v963, %v966
        %v1000 = vld [vmem:[%s298] sm:$0x1]
        %v1002 = vperm.slane %v1000, 0
        %v1004 = vadd.f32 %v968, %v1002
        %v1005 = vadd.f32 %v969, %v1002
        %v1006 = vadd.f32 %v970, %v1002
        %v1007 = vadd.f32 %v971, %v1002
        %v1008 = vadd.f32 %v972, %v1002
        %v1009 = vadd.f32 %v973, %v1002
        %v1010 = vadd.f32 %v974, %v1002
        %v1011 = vadd.f32 %v975, %v1002
        %v1012 = vadd.f32 %v976, %v1002
        %v1013 = vadd.f32 %v977, %v1002
        %v1014 = vadd.f32 %v978, %v1002
        %v1015 = vadd.f32 %v979, %v1002
        %v1016 = vadd.f32 %v980, %v1002
        %v1017 = vadd.f32 %v981, %v1002
        %v1018 = vadd.f32 %v982, %v1002
        %v1019 = vadd.f32 %v983, %v1002
        %v1020 = vadd.f32 %v984, %v1002
        %v1021 = vadd.f32 %v985, %v1002
        %v1022 = vadd.f32 %v986, %v1002
        %v1023 = vadd.f32 %v987, %v1002
        %v1024 = vadd.f32 %v988, %v1002
        %v1025 = vadd.f32 %v989, %v1002
        %v1026 = vadd.f32 %v990, %v1002
        %v1027 = vadd.f32 %v991, %v1002
        %v1028 = vadd.f32 %v992, %v1002
        %v1029 = vadd.f32 %v993, %v1002
        %v1030 = vadd.f32 %v994, %v1002
        %v1031 = vadd.f32 %v995, %v1002
        %v1032 = vadd.f32 %v996, %v1002
        %v1033 = vadd.f32 %v997, %v1002
        %v1034 = vadd.f32 %v998, %v1002
        %v1035 = vadd.f32 %v999, %v1002
        %v1036 = vmul.f32 %v1004, 0.70710677
        %v1037 = vmul.f32 %v1005, 0.70710677
        %v1038 = vmul.f32 %v1006, 0.70710677
        %v1039 = vmul.f32 %v1007, 0.70710677
        %v1040 = vmul.f32 %v1008, 0.70710677
        %v1041 = vmul.f32 %v1009, 0.70710677
        %v1042 = vmul.f32 %v1010, 0.70710677
        %v1043 = vmul.f32 %v1011, 0.70710677
        %v1044 = vmul.f32 %v1012, 0.70710677
        %v1045 = vmul.f32 %v1013, 0.70710677
        %v1046 = vmul.f32 %v1014, 0.70710677
        %v1047 = vmul.f32 %v1015, 0.70710677
        %v1048 = vmul.f32 %v1016, 0.70710677
        %v1049 = vmul.f32 %v1017, 0.70710677
        %v1050 = vmul.f32 %v1018, 0.70710677
        %v1051 = vmul.f32 %v1019, 0.70710677
        %v1052 = vmul.f32 %v1020, 0.70710677
        %v1053 = vmul.f32 %v1021, 0.70710677
        %v1054 = vmul.f32 %v1022, 0.70710677
        %v1055 = vmul.f32 %v1023, 0.70710677
        %v1056 = vmul.f32 %v1024, 0.70710677
        %v1057 = vmul.f32 %v1025, 0.70710677
        %v1058 = vmul.f32 %v1026, 0.70710677
        %v1059 = vmul.f32 %v1027, 0.70710677
        %v1060 = vmul.f32 %v1028, 0.70710677
        %v1061 = vmul.f32 %v1029, 0.70710677
        %v1062 = vmul.f32 %v1030, 0.70710677
        %v1063 = vmul.f32 %v1031, 0.70710677
        %v1064 = vmul.f32 %v1032, 0.70710677
        %v1065 = vmul.f32 %v1033, 0.70710677
        %v1066 = vmul.f32 %v1034, 0.70710677
        %v1067 = vmul.f32 %v1035, 0.70710677
        %v1068 = vand.u32 2147483647, %v1036
        %v1069 = vand.u32 2147483647, %v1037
        %v1070 = vand.u32 2147483647, %v1038
        %v1071 = vand.u32 2147483647, %v1039
        %v1072 = vand.u32 2147483647, %v1040
        %v1073 = vand.u32 2147483647, %v1041
        %v1074 = vand.u32 2147483647, %v1042
        %v1075 = vand.u32 2147483647, %v1043
        %v1076 = vand.u32 2147483647, %v1044
        %v1077 = vand.u32 2147483647, %v1045
        %v1078 = vand.u32 2147483647, %v1046
        %v1079 = vand.u32 2147483647, %v1047
        %v1080 = vand.u32 2147483647, %v1048
        %v1081 = vand.u32 2147483647, %v1049
        %v1082 = vand.u32 2147483647, %v1050
        %v1083 = vand.u32 2147483647, %v1051
        %v1084 = vand.u32 2147483647, %v1052
        %v1085 = vand.u32 2147483647, %v1053
        %v1086 = vand.u32 2147483647, %v1054
        %v1087 = vand.u32 2147483647, %v1055
        %v1088 = vand.u32 2147483647, %v1056
        %v1089 = vand.u32 2147483647, %v1057
        %v1090 = vand.u32 2147483647, %v1058
        %v1091 = vand.u32 2147483647, %v1059
        %v1092 = vand.u32 2147483647, %v1060
        %v1093 = vand.u32 2147483647, %v1061
        %v1094 = vand.u32 2147483647, %v1062
        %v1095 = vand.u32 2147483647, %v1063
        %v1096 = vand.u32 2147483647, %v1064
        %v1097 = vand.u32 2147483647, %v1065
        %v1098 = vand.u32 2147483647, %v1066
        %v1099 = vand.u32 2147483647, %v1067
        %v1100 = vmul.f32 %v1068, 0.3275911
        %v1101 = vmul.f32 %v1069, 0.3275911
        %v1102 = vmul.f32 %v1070, 0.3275911
        %v1103 = vmul.f32 %v1071, 0.3275911
        %v1104 = vmul.f32 %v1072, 0.3275911
        %v1105 = vmul.f32 %v1073, 0.3275911
        %v1106 = vmul.f32 %v1074, 0.3275911
        %v1107 = vmul.f32 %v1075, 0.3275911
        %v1108 = vmul.f32 %v1076, 0.3275911
        %v1109 = vmul.f32 %v1077, 0.3275911
        %v1110 = vmul.f32 %v1078, 0.3275911
        %v1111 = vmul.f32 %v1079, 0.3275911
        %v1112 = vmul.f32 %v1080, 0.3275911
        %v1113 = vmul.f32 %v1081, 0.3275911
        %v1114 = vmul.f32 %v1082, 0.3275911
        %v1115 = vmul.f32 %v1083, 0.3275911
        %v1116 = vmul.f32 %v1084, 0.3275911
        %v1117 = vmul.f32 %v1085, 0.3275911
        %v1118 = vmul.f32 %v1086, 0.3275911
        %v1119 = vmul.f32 %v1087, 0.3275911
        %v1120 = vmul.f32 %v1088, 0.3275911
        %v1121 = vmul.f32 %v1089, 0.3275911
        %v1122 = vmul.f32 %v1090, 0.3275911
        %v1123 = vmul.f32 %v1091, 0.3275911
        %v1124 = vmul.f32 %v1092, 0.3275911
        %v1125 = vmul.f32 %v1093, 0.3275911
        %v1126 = vmul.f32 %v1094, 0.3275911
        %v1127 = vmul.f32 %v1095, 0.3275911
        %v1128 = vmul.f32 %v1096, 0.3275911
        %v1129 = vmul.f32 %v1097, 0.3275911
        %v1130 = vmul.f32 %v1098, 0.3275911
        %v1131 = vmul.f32 %v1099, 0.3275911
        %v1132 = vadd.f32 %v1100, 1.0
        %v1133 = vadd.f32 %v1101, 1.0
        %v1134 = vadd.f32 %v1102, 1.0
        %v1135 = vadd.f32 %v1103, 1.0
        %v1136 = vadd.f32 %v1104, 1.0
        %v1137 = vadd.f32 %v1105, 1.0
        %v1138 = vadd.f32 %v1106, 1.0
        %v1139 = vadd.f32 %v1107, 1.0
        %v1140 = vadd.f32 %v1108, 1.0
        %v1141 = vadd.f32 %v1109, 1.0
        %v1142 = vadd.f32 %v1110, 1.0
        %v1143 = vadd.f32 %v1111, 1.0
        %v1144 = vadd.f32 %v1112, 1.0
        %v1145 = vadd.f32 %v1113, 1.0
        %v1146 = vadd.f32 %v1114, 1.0
        %v1147 = vadd.f32 %v1115, 1.0
        %v1148 = vadd.f32 %v1116, 1.0
        %v1149 = vadd.f32 %v1117, 1.0
        %v1150 = vadd.f32 %v1118, 1.0
        %v1151 = vadd.f32 %v1119, 1.0
        %v1152 = vadd.f32 %v1120, 1.0
        %v1153 = vadd.f32 %v1121, 1.0
        %v1154 = vadd.f32 %v1122, 1.0
        %v1155 = vadd.f32 %v1123, 1.0
        %v1156 = vadd.f32 %v1124, 1.0
        %v1157 = vadd.f32 %v1125, 1.0
        %v1158 = vadd.f32 %v1126, 1.0
        %v1159 = vadd.f32 %v1127, 1.0
        %v1160 = vadd.f32 %v1128, 1.0
        %v1161 = vadd.f32 %v1129, 1.0
        %v1162 = vadd.f32 %v1130, 1.0
        %v1163 = vadd.f32 %v1131, 1.0
        %v1164 = vrcp.pop %v1132
        %v1165 = vmul.f32 %v1132, %v1164
        %v1166 = vsub.f32 1.0, %v1165
        %v1167 = vmul.f32 %v1164, %v1166
        %v1168 = vadd.f32 %v1164, %v1167
        %vm1169 = vweird.f32 %v1132
        %vm1170 = vweird.f32 %v1164
        %vm1171 = vmor %vm1169, %vm1170
        %v1172 = vsel %vm1171, %v1164, %v1168
        %v1173 = vand.u32 2147483647, %v1132
        %vm1174 = vcmp.eq.f32.partialorder %v1173, 8.507059e+37
        %v1175 = vand.u32 %v1132, 2147483648
        %v1176 = vor.u32 1.1754944e-38, %v1175
        %v1177 = vsel %vm1174, %v1176, %v1172
        %v1178 = vmul.f32 1.0, %v1177
        %v1179 = vrcp.pop %v1133
        %v1180 = vmul.f32 %v1133, %v1179
        %v1181 = vsub.f32 1.0, %v1180
        %v1182 = vmul.f32 %v1179, %v1181
        %v1183 = vadd.f32 %v1179, %v1182
        %vm1184 = vweird.f32 %v1133
        %vm1185 = vweird.f32 %v1179
        %vm1186 = vmor %vm1184, %vm1185
        %v1187 = vsel %vm1186, %v1179, %v1183
        %v1188 = vand.u32 2147483647, %v1133
        %vm1189 = vcmp.eq.f32.partialorder %v1188, 8.507059e+37
        %v1190 = vand.u32 %v1133, 2147483648
        %v1191 = vor.u32 1.1754944e-38, %v1190
        %v1192 = vsel %vm1189, %v1191, %v1187
        %v1193 = vmul.f32 1.0, %v1192
        %v1194 = vrcp.pop %v1134
        %v1195 = vmul.f32 %v1134, %v1194
        %v1196 = vsub.f32 1.0, %v1195
        %v1197 = vmul.f32 %v1194, %v1196
        %v1198 = vadd.f32 %v1194, %v1197
        %vm1199 = vweird.f32 %v1134
        %vm1200 = vweird.f32 %v1194
        %vm1201 = vmor %vm1199, %vm1200
        %v1202 = vsel %vm1201, %v1194, %v1198
        %v1203 = vand.u32 2147483647, %v1134
        %vm1204 = vcmp.eq.f32.partialorder %v1203, 8.507059e+37
        %v1205 = vand.u32 %v1134, 2147483648
        %v1206 = vor.u32 1.1754944e-38, %v1205
        %v1207 = vsel %vm1204, %v1206, %v1202
        %v1208 = vmul.f32 1.0, %v1207
        %v1209 = vrcp.pop %v1135
        %v1210 = vmul.f32 %v1135, %v1209
        %v1211 = vsub.f32 1.0, %v1210
        %v1212 = vmul.f32 %v1209, %v1211
        %v1213 = vadd.f32 %v1209, %v1212
        %vm1214 = vweird.f32 %v1135
        %vm1215 = vweird.f32 %v1209
        %vm1216 = vmor %vm1214, %vm1215
        %v1217 = vsel %vm1216, %v1209, %v1213
        %v1218 = vand.u32 2147483647, %v1135
        %vm1219 = vcmp.eq.f32.partialorder %v1218, 8.507059e+37
        %v1220 = vand.u32 %v1135, 2147483648
        %v1221 = vor.u32 1.1754944e-38, %v1220
        %v1222 = vsel %vm1219, %v1221, %v1217
        %v1223 = vmul.f32 1.0, %v1222
        %v1224 = vrcp.pop %v1136
        %v1225 = vmul.f32 %v1136, %v1224
        %v1226 = vsub.f32 1.0, %v1225
        %v1227 = vmul.f32 %v1224, %v1226
        %v1228 = vadd.f32 %v1224, %v1227
        %vm1229 = vweird.f32 %v1136
        %vm1230 = vweird.f32 %v1224
        %vm1231 = vmor %vm1229, %vm1230
        %v1232 = vsel %vm1231, %v1224, %v1228
        %v1233 = vand.u32 2147483647, %v1136
        %vm1234 = vcmp.eq.f32.partialorder %v1233, 8.507059e+37
        %v1235 = vand.u32 %v1136, 2147483648
        %v1236 = vor.u32 1.1754944e-38, %v1235
        %v1237 = vsel %vm1234, %v1236, %v1232
        %v1238 = vmul.f32 1.0, %v1237
        %v1239 = vrcp.pop %v1137
        %v1240 = vmul.f32 %v1137, %v1239
        %v1241 = vsub.f32 1.0, %v1240
        %v1242 = vmul.f32 %v1239, %v1241
        %v1243 = vadd.f32 %v1239, %v1242
        %vm1244 = vweird.f32 %v1137
        %vm1245 = vweird.f32 %v1239
        %vm1246 = vmor %vm1244, %vm1245
        %v1247 = vsel %vm1246, %v1239, %v1243
        %v1248 = vand.u32 2147483647, %v1137
        %vm1249 = vcmp.eq.f32.partialorder %v1248, 8.507059e+37
        %v1250 = vand.u32 %v1137, 2147483648
        %v1251 = vor.u32 1.1754944e-38, %v1250
        %v1252 = vsel %vm1249, %v1251, %v1247
        %v1253 = vmul.f32 1.0, %v1252
        %v1254 = vrcp.pop %v1138
        %v1255 = vmul.f32 %v1138, %v1254
        %v1256 = vsub.f32 1.0, %v1255
        %v1257 = vmul.f32 %v1254, %v1256
        %v1258 = vadd.f32 %v1254, %v1257
        %vm1259 = vweird.f32 %v1138
        %vm1260 = vweird.f32 %v1254
        %vm1261 = vmor %vm1259, %vm1260
        %v1262 = vsel %vm1261, %v1254, %v1258
        %v1263 = vand.u32 2147483647, %v1138
        %vm1264 = vcmp.eq.f32.partialorder %v1263, 8.507059e+37
        %v1265 = vand.u32 %v1138, 2147483648
        %v1266 = vor.u32 1.1754944e-38, %v1265
        %v1267 = vsel %vm1264, %v1266, %v1262
        %v1268 = vmul.f32 1.0, %v1267
        %v1269 = vrcp.pop %v1139
        %v1270 = vmul.f32 %v1139, %v1269
        %v1271 = vsub.f32 1.0, %v1270
        %v1272 = vmul.f32 %v1269, %v1271
        %v1273 = vadd.f32 %v1269, %v1272
        %vm1274 = vweird.f32 %v1139
        %vm1275 = vweird.f32 %v1269
        %vm1276 = vmor %vm1274, %vm1275
        %v1277 = vsel %vm1276, %v1269, %v1273
        %v1278 = vand.u32 2147483647, %v1139
        %vm1279 = vcmp.eq.f32.partialorder %v1278, 8.507059e+37
        %v1280 = vand.u32 %v1139, 2147483648
        %v1281 = vor.u32 1.1754944e-38, %v1280
        %v1282 = vsel %vm1279, %v1281, %v1277
        %v1283 = vmul.f32 1.0, %v1282
        %v1284 = vrcp.pop %v1140
        %v1285 = vmul.f32 %v1140, %v1284
        %v1286 = vsub.f32 1.0, %v1285
        %v1287 = vmul.f32 %v1284, %v1286
        %v1288 = vadd.f32 %v1284, %v1287
        %vm1289 = vweird.f32 %v1140
        %vm1290 = vweird.f32 %v1284
        %vm1291 = vmor %vm1289, %vm1290
        %v1292 = vsel %vm1291, %v1284, %v1288
        %v1293 = vand.u32 2147483647, %v1140
        %vm1294 = vcmp.eq.f32.partialorder %v1293, 8.507059e+37
        %v1295 = vand.u32 %v1140, 2147483648
        %v1296 = vor.u32 1.1754944e-38, %v1295
        %v1297 = vsel %vm1294, %v1296, %v1292
        %v1298 = vmul.f32 1.0, %v1297
        %v1299 = vrcp.pop %v1141
        %v1300 = vmul.f32 %v1141, %v1299
        %v1301 = vsub.f32 1.0, %v1300
        %v1302 = vmul.f32 %v1299, %v1301
        %v1303 = vadd.f32 %v1299, %v1302
        %vm1304 = vweird.f32 %v1141
        %vm1305 = vweird.f32 %v1299
        %vm1306 = vmor %vm1304, %vm1305
        %v1307 = vsel %vm1306, %v1299, %v1303
        %v1308 = vand.u32 2147483647, %v1141
        %vm1309 = vcmp.eq.f32.partialorder %v1308, 8.507059e+37
        %v1310 = vand.u32 %v1141, 2147483648
        %v1311 = vor.u32 1.1754944e-38, %v1310
        %v1312 = vsel %vm1309, %v1311, %v1307
        %v1313 = vmul.f32 1.0, %v1312
        %v1314 = vrcp.pop %v1142
        %v1315 = vmul.f32 %v1142, %v1314
        %v1316 = vsub.f32 1.0, %v1315
        %v1317 = vmul.f32 %v1314, %v1316
        %v1318 = vadd.f32 %v1314, %v1317
        %vm1319 = vweird.f32 %v1142
        %vm1320 = vweird.f32 %v1314
        %vm1321 = vmor %vm1319, %vm1320
        %v1322 = vsel %vm1321, %v1314, %v1318
        %v1323 = vand.u32 2147483647, %v1142
        %vm1324 = vcmp.eq.f32.partialorder %v1323, 8.507059e+37
        %v1325 = vand.u32 %v1142, 2147483648
        %v1326 = vor.u32 1.1754944e-38, %v1325
        %v1327 = vsel %vm1324, %v1326, %v1322
        %v1328 = vmul.f32 1.0, %v1327
        %v1329 = vrcp.pop %v1143
        %v1330 = vmul.f32 %v1143, %v1329
        %v1331 = vsub.f32 1.0, %v1330
        %v1332 = vmul.f32 %v1329, %v1331
        %v1333 = vadd.f32 %v1329, %v1332
        %vm1334 = vweird.f32 %v1143
        %vm1335 = vweird.f32 %v1329
        %vm1336 = vmor %vm1334, %vm1335
        %v1337 = vsel %vm1336, %v1329, %v1333
        %v1338 = vand.u32 2147483647, %v1143
        %vm1339 = vcmp.eq.f32.partialorder %v1338, 8.507059e+37
        %v1340 = vand.u32 %v1143, 2147483648
        %v1341 = vor.u32 1.1754944e-38, %v1340
        %v1342 = vsel %vm1339, %v1341, %v1337
        %v1343 = vmul.f32 1.0, %v1342
        %v1344 = vrcp.pop %v1144
        %v1345 = vmul.f32 %v1144, %v1344
        %v1346 = vsub.f32 1.0, %v1345
        %v1347 = vmul.f32 %v1344, %v1346
        %v1348 = vadd.f32 %v1344, %v1347
        %vm1349 = vweird.f32 %v1144
        %vm1350 = vweird.f32 %v1344
        %vm1351 = vmor %vm1349, %vm1350
        %v1352 = vsel %vm1351, %v1344, %v1348
        %v1353 = vand.u32 2147483647, %v1144
        %vm1354 = vcmp.eq.f32.partialorder %v1353, 8.507059e+37
        %v1355 = vand.u32 %v1144, 2147483648
        %v1356 = vor.u32 1.1754944e-38, %v1355
        %v1357 = vsel %vm1354, %v1356, %v1352
        %v1358 = vmul.f32 1.0, %v1357
        %v1359 = vrcp.pop %v1145
        %v1360 = vmul.f32 %v1145, %v1359
        %v1361 = vsub.f32 1.0, %v1360
        %v1362 = vmul.f32 %v1359, %v1361
        %v1363 = vadd.f32 %v1359, %v1362
        %vm1364 = vweird.f32 %v1145
        %vm1365 = vweird.f32 %v1359
        %vm1366 = vmor %vm1364, %vm1365
        %v1367 = vsel %vm1366, %v1359, %v1363
        %v1368 = vand.u32 2147483647, %v1145
        %vm1369 = vcmp.eq.f32.partialorder %v1368, 8.507059e+37
        %v1370 = vand.u32 %v1145, 2147483648
        %v1371 = vor.u32 1.1754944e-38, %v1370
        %v1372 = vsel %vm1369, %v1371, %v1367
        %v1373 = vmul.f32 1.0, %v1372
        %v1374 = vrcp.pop %v1146
        %v1375 = vmul.f32 %v1146, %v1374
        %v1376 = vsub.f32 1.0, %v1375
        %v1377 = vmul.f32 %v1374, %v1376
        %v1378 = vadd.f32 %v1374, %v1377
        %vm1379 = vweird.f32 %v1146
        %vm1380 = vweird.f32 %v1374
        %vm1381 = vmor %vm1379, %vm1380
        %v1382 = vsel %vm1381, %v1374, %v1378
        %v1383 = vand.u32 2147483647, %v1146
        %vm1384 = vcmp.eq.f32.partialorder %v1383, 8.507059e+37
        %v1385 = vand.u32 %v1146, 2147483648
        %v1386 = vor.u32 1.1754944e-38, %v1385
        %v1387 = vsel %vm1384, %v1386, %v1382
        %v1388 = vmul.f32 1.0, %v1387
        %v1389 = vrcp.pop %v1147
        %v1390 = vmul.f32 %v1147, %v1389
        %v1391 = vsub.f32 1.0, %v1390
        %v1392 = vmul.f32 %v1389, %v1391
        %v1393 = vadd.f32 %v1389, %v1392
        %vm1394 = vweird.f32 %v1147
        %vm1395 = vweird.f32 %v1389
        %vm1396 = vmor %vm1394, %vm1395
        %v1397 = vsel %vm1396, %v1389, %v1393
        %v1398 = vand.u32 2147483647, %v1147
        %vm1399 = vcmp.eq.f32.partialorder %v1398, 8.507059e+37
        %v1400 = vand.u32 %v1147, 2147483648
        %v1401 = vor.u32 1.1754944e-38, %v1400
        %v1402 = vsel %vm1399, %v1401, %v1397
        %v1403 = vmul.f32 1.0, %v1402
        %v1404 = vrcp.pop %v1148
        %v1405 = vmul.f32 %v1148, %v1404
        %v1406 = vsub.f32 1.0, %v1405
        %v1407 = vmul.f32 %v1404, %v1406
        %v1408 = vadd.f32 %v1404, %v1407
        %vm1409 = vweird.f32 %v1148
        %vm1410 = vweird.f32 %v1404
        %vm1411 = vmor %vm1409, %vm1410
        %v1412 = vsel %vm1411, %v1404, %v1408
        %v1413 = vand.u32 2147483647, %v1148
        %vm1414 = vcmp.eq.f32.partialorder %v1413, 8.507059e+37
        %v1415 = vand.u32 %v1148, 2147483648
        %v1416 = vor.u32 1.1754944e-38, %v1415
        %v1417 = vsel %vm1414, %v1416, %v1412
        %v1418 = vmul.f32 1.0, %v1417
        %v1419 = vrcp.pop %v1149
        %v1420 = vmul.f32 %v1149, %v1419
        %v1421 = vsub.f32 1.0, %v1420
        %v1422 = vmul.f32 %v1419, %v1421
        %v1423 = vadd.f32 %v1419, %v1422
        %vm1424 = vweird.f32 %v1149
        %vm1425 = vweird.f32 %v1419
        %vm1426 = vmor %vm1424, %vm1425
        %v1427 = vsel %vm1426, %v1419, %v1423
        %v1428 = vand.u32 2147483647, %v1149
        %vm1429 = vcmp.eq.f32.partialorder %v1428, 8.507059e+37
        %v1430 = vand.u32 %v1149, 2147483648
        %v1431 = vor.u32 1.1754944e-38, %v1430
        %v1432 = vsel %vm1429, %v1431, %v1427
        %v1433 = vmul.f32 1.0, %v1432
        %v1434 = vrcp.pop %v1150
        %v1435 = vmul.f32 %v1150, %v1434
        %v1436 = vsub.f32 1.0, %v1435
        %v1437 = vmul.f32 %v1434, %v1436
        %v1438 = vadd.f32 %v1434, %v1437
        %vm1439 = vweird.f32 %v1150
        %vm1440 = vweird.f32 %v1434
        %vm1441 = vmor %vm1439, %vm1440
        %v1442 = vsel %vm1441, %v1434, %v1438
        %v1443 = vand.u32 2147483647, %v1150
        %vm1444 = vcmp.eq.f32.partialorder %v1443, 8.507059e+37
        %v1445 = vand.u32 %v1150, 2147483648
        %v1446 = vor.u32 1.1754944e-38, %v1445
        %v1447 = vsel %vm1444, %v1446, %v1442
        %v1448 = vmul.f32 1.0, %v1447
        %v1449 = vrcp.pop %v1151
        %v1450 = vmul.f32 %v1151, %v1449
        %v1451 = vsub.f32 1.0, %v1450
        %v1452 = vmul.f32 %v1449, %v1451
        %v1453 = vadd.f32 %v1449, %v1452
        %vm1454 = vweird.f32 %v1151
        %vm1455 = vweird.f32 %v1449
        %vm1456 = vmor %vm1454, %vm1455
        %v1457 = vsel %vm1456, %v1449, %v1453
        %v1458 = vand.u32 2147483647, %v1151
        %vm1459 = vcmp.eq.f32.partialorder %v1458, 8.507059e+37
        %v1460 = vand.u32 %v1151, 2147483648
        %v1461 = vor.u32 1.1754944e-38, %v1460
        %v1462 = vsel %vm1459, %v1461, %v1457
        %v1463 = vmul.f32 1.0, %v1462
        %v1464 = vrcp.pop %v1152
        %v1465 = vmul.f32 %v1152, %v1464
        %v1466 = vsub.f32 1.0, %v1465
        %v1467 = vmul.f32 %v1464, %v1466
        %v1468 = vadd.f32 %v1464, %v1467
        %vm1469 = vweird.f32 %v1152
        %vm1470 = vweird.f32 %v1464
        %vm1471 = vmor %vm1469, %vm1470
        %v1472 = vsel %vm1471, %v1464, %v1468
        %v1473 = vand.u32 2147483647, %v1152
        %vm1474 = vcmp.eq.f32.partialorder %v1473, 8.507059e+37
        %v1475 = vand.u32 %v1152, 2147483648
        %v1476 = vor.u32 1.1754944e-38, %v1475
        %v1477 = vsel %vm1474, %v1476, %v1472
        %v1478 = vmul.f32 1.0, %v1477
        %v1479 = vrcp.pop %v1153
        %v1480 = vmul.f32 %v1153, %v1479
        %v1481 = vsub.f32 1.0, %v1480
        %v1482 = vmul.f32 %v1479, %v1481
        %v1483 = vadd.f32 %v1479, %v1482
        %vm1484 = vweird.f32 %v1153
        %vm1485 = vweird.f32 %v1479
        %vm1486 = vmor %vm1484, %vm1485
        %v1487 = vsel %vm1486, %v1479, %v1483
        %v1488 = vand.u32 2147483647, %v1153
        %vm1489 = vcmp.eq.f32.partialorder %v1488, 8.507059e+37
        %v1490 = vand.u32 %v1153, 2147483648
        %v1491 = vor.u32 1.1754944e-38, %v1490
        %v1492 = vsel %vm1489, %v1491, %v1487
        %v1493 = vmul.f32 1.0, %v1492
        %v1494 = vrcp.pop %v1154
        %v1495 = vmul.f32 %v1154, %v1494
        %v1496 = vsub.f32 1.0, %v1495
        %v1497 = vmul.f32 %v1494, %v1496
        %v1498 = vadd.f32 %v1494, %v1497
        %vm1499 = vweird.f32 %v1154
        %vm1500 = vweird.f32 %v1494
        %vm1501 = vmor %vm1499, %vm1500
        %v1502 = vsel %vm1501, %v1494, %v1498
        %v1503 = vand.u32 2147483647, %v1154
        %vm1504 = vcmp.eq.f32.partialorder %v1503, 8.507059e+37
        %v1505 = vand.u32 %v1154, 2147483648
        %v1506 = vor.u32 1.1754944e-38, %v1505
        %v1507 = vsel %vm1504, %v1506, %v1502
        %v1508 = vmul.f32 1.0, %v1507
        %v1509 = vrcp.pop %v1155
        %v1510 = vmul.f32 %v1155, %v1509
        %v1511 = vsub.f32 1.0, %v1510
        %v1512 = vmul.f32 %v1509, %v1511
        %v1513 = vadd.f32 %v1509, %v1512
        %vm1514 = vweird.f32 %v1155
        %vm1515 = vweird.f32 %v1509
        %vm1516 = vmor %vm1514, %vm1515
        %v1517 = vsel %vm1516, %v1509, %v1513
        %v1518 = vand.u32 2147483647, %v1155
        %vm1519 = vcmp.eq.f32.partialorder %v1518, 8.507059e+37
        %v1520 = vand.u32 %v1155, 2147483648
        %v1521 = vor.u32 1.1754944e-38, %v1520
        %v1522 = vsel %vm1519, %v1521, %v1517
        %v1523 = vmul.f32 1.0, %v1522
        %v1524 = vrcp.pop %v1156
        %v1525 = vmul.f32 %v1156, %v1524
        %v1526 = vsub.f32 1.0, %v1525
        %v1527 = vmul.f32 %v1524, %v1526
        %v1528 = vadd.f32 %v1524, %v1527
        %vm1529 = vweird.f32 %v1156
        %vm1530 = vweird.f32 %v1524
        %vm1531 = vmor %vm1529, %vm1530
        %v1532 = vsel %vm1531, %v1524, %v1528
        %v1533 = vand.u32 2147483647, %v1156
        %vm1534 = vcmp.eq.f32.partialorder %v1533, 8.507059e+37
        %v1535 = vand.u32 %v1156, 2147483648
        %v1536 = vor.u32 1.1754944e-38, %v1535
        %v1537 = vsel %vm1534, %v1536, %v1532
        %v1538 = vmul.f32 1.0, %v1537
        %v1539 = vrcp.pop %v1157
        %v1540 = vmul.f32 %v1157, %v1539
        %v1541 = vsub.f32 1.0, %v1540
        %v1542 = vmul.f32 %v1539, %v1541
        %v1543 = vadd.f32 %v1539, %v1542
        %vm1544 = vweird.f32 %v1157
        %vm1545 = vweird.f32 %v1539
        %vm1546 = vmor %vm1544, %vm1545
        %v1547 = vsel %vm1546, %v1539, %v1543
        %v1548 = vand.u32 2147483647, %v1157
        %vm1549 = vcmp.eq.f32.partialorder %v1548, 8.507059e+37
        %v1550 = vand.u32 %v1157, 2147483648
        %v1551 = vor.u32 1.1754944e-38, %v1550
        %v1552 = vsel %vm1549, %v1551, %v1547
        %v1553 = vmul.f32 1.0, %v1552
        %v1554 = vrcp.pop %v1158
        %v1555 = vmul.f32 %v1158, %v1554
        %v1556 = vsub.f32 1.0, %v1555
        %v1557 = vmul.f32 %v1554, %v1556
        %v1558 = vadd.f32 %v1554, %v1557
        %vm1559 = vweird.f32 %v1158
        %vm1560 = vweird.f32 %v1554
        %vm1561 = vmor %vm1559, %vm1560
        %v1562 = vsel %vm1561, %v1554, %v1558
        %v1563 = vand.u32 2147483647, %v1158
        %vm1564 = vcmp.eq.f32.partialorder %v1563, 8.507059e+37
        %v1565 = vand.u32 %v1158, 2147483648
        %v1566 = vor.u32 1.1754944e-38, %v1565
        %v1567 = vsel %vm1564, %v1566, %v1562
        %v1568 = vmul.f32 1.0, %v1567
        %v1569 = vrcp.pop %v1159
        %v1570 = vmul.f32 %v1159, %v1569
        %v1571 = vsub.f32 1.0, %v1570
        %v1572 = vmul.f32 %v1569, %v1571
        %v1573 = vadd.f32 %v1569, %v1572
        %vm1574 = vweird.f32 %v1159
        %vm1575 = vweird.f32 %v1569
        %vm1576 = vmor %vm1574, %vm1575
        %v1577 = vsel %vm1576, %v1569, %v1573
        %v1578 = vand.u32 2147483647, %v1159
        %vm1579 = vcmp.eq.f32.partialorder %v1578, 8.507059e+37
        %v1580 = vand.u32 %v1159, 2147483648
        %v1581 = vor.u32 1.1754944e-38, %v1580
        %v1582 = vsel %vm1579, %v1581, %v1577
        %v1583 = vmul.f32 1.0, %v1582
        %v1584 = vrcp.pop %v1160
        %v1585 = vmul.f32 %v1160, %v1584
        %v1586 = vsub.f32 1.0, %v1585
        %v1587 = vmul.f32 %v1584, %v1586
        %v1588 = vadd.f32 %v1584, %v1587
        %vm1589 = vweird.f32 %v1160
        %vm1590 = vweird.f32 %v1584
        %vm1591 = vmor %vm1589, %vm1590
        %v1592 = vsel %vm1591, %v1584, %v1588
        %v1593 = vand.u32 2147483647, %v1160
        %vm1594 = vcmp.eq.f32.partialorder %v1593, 8.507059e+37
        %v1595 = vand.u32 %v1160, 2147483648
        %v1596 = vor.u32 1.1754944e-38, %v1595
        %v1597 = vsel %vm1594, %v1596, %v1592
        %v1598 = vmul.f32 1.0, %v1597
        %v1599 = vrcp.pop %v1161
        %v1600 = vmul.f32 %v1161, %v1599
        %v1601 = vsub.f32 1.0, %v1600
        %v1602 = vmul.f32 %v1599, %v1601
        %v1603 = vadd.f32 %v1599, %v1602
        %vm1604 = vweird.f32 %v1161
        %vm1605 = vweird.f32 %v1599
        %vm1606 = vmor %vm1604, %vm1605
        %v1607 = vsel %vm1606, %v1599, %v1603
        %v1608 = vand.u32 2147483647, %v1161
        %vm1609 = vcmp.eq.f32.partialorder %v1608, 8.507059e+37
        %v1610 = vand.u32 %v1161, 2147483648
        %v1611 = vor.u32 1.1754944e-38, %v1610
        %v1612 = vsel %vm1609, %v1611, %v1607
        %v1613 = vmul.f32 1.0, %v1612
        %v1614 = vrcp.pop %v1162
        %v1615 = vmul.f32 %v1162, %v1614
        %v1616 = vsub.f32 1.0, %v1615
        %v1617 = vmul.f32 %v1614, %v1616
        %v1618 = vadd.f32 %v1614, %v1617
        %vm1619 = vweird.f32 %v1162
        %vm1620 = vweird.f32 %v1614
        %vm1621 = vmor %vm1619, %vm1620
        %v1622 = vsel %vm1621, %v1614, %v1618
        %v1623 = vand.u32 2147483647, %v1162
        %vm1624 = vcmp.eq.f32.partialorder %v1623, 8.507059e+37
        %v1625 = vand.u32 %v1162, 2147483648
        %v1626 = vor.u32 1.1754944e-38, %v1625
        %v1627 = vsel %vm1624, %v1626, %v1622
        %v1628 = vmul.f32 1.0, %v1627
        %v1629 = vrcp.pop %v1163
        %v1630 = vmul.f32 %v1163, %v1629
        %v1631 = vsub.f32 1.0, %v1630
        %v1632 = vmul.f32 %v1629, %v1631
        %v1633 = vadd.f32 %v1629, %v1632
        %vm1634 = vweird.f32 %v1163
        %vm1635 = vweird.f32 %v1629
        %vm1636 = vmor %vm1634, %vm1635
        %v1637 = vsel %vm1636, %v1629, %v1633
        %v1638 = vand.u32 2147483647, %v1163
        %vm1639 = vcmp.eq.f32.partialorder %v1638, 8.507059e+37
        %v1640 = vand.u32 %v1163, 2147483648
        %v1641 = vor.u32 1.1754944e-38, %v1640
        %v1642 = vsel %vm1639, %v1641, %v1637
        %v1643 = vmul.f32 1.0, %v1642
        %v1644 = vmul.f32 %v1178, 1.0614054
        %v1645 = vmul.f32 %v1193, 1.0614054
        %v1646 = vmul.f32 %v1208, 1.0614054
        %v1647 = vmul.f32 %v1223, 1.0614054
        %v1648 = vmul.f32 %v1238, 1.0614054
        %v1649 = vmul.f32 %v1253, 1.0614054
        %v1650 = vmul.f32 %v1268, 1.0614054
        %v1651 = vmul.f32 %v1283, 1.0614054
        %v1652 = vmul.f32 %v1298, 1.0614054
        %v1653 = vmul.f32 %v1313, 1.0614054
        %v1654 = vmul.f32 %v1328, 1.0614054
        %v1655 = vmul.f32 %v1343, 1.0614054
        %v1656 = vmul.f32 %v1358, 1.0614054
        %v1657 = vmul.f32 %v1373, 1.0614054
        %v1658 = vmul.f32 %v1388, 1.0614054
        %v1659 = vmul.f32 %v1403, 1.0614054
        %v1660 = vmul.f32 %v1418, 1.0614054
        %v1661 = vmul.f32 %v1433, 1.0614054
        %v1662 = vmul.f32 %v1448, 1.0614054
        %v1663 = vmul.f32 %v1463, 1.0614054
        %v1664 = vmul.f32 %v1478, 1.0614054
        %v1665 = vmul.f32 %v1493, 1.0614054
        %v1666 = vmul.f32 %v1508, 1.0614054
        %v1667 = vmul.f32 %v1523, 1.0614054
        %v1668 = vmul.f32 %v1538, 1.0614054
        %v1669 = vmul.f32 %v1553, 1.0614054
        %v1670 = vmul.f32 %v1568, 1.0614054
        %v1671 = vmul.f32 %v1583, 1.0614054
        %v1672 = vmul.f32 %v1598, 1.0614054
        %v1673 = vmul.f32 %v1613, 1.0614054
        %v1674 = vmul.f32 %v1628, 1.0614054
        %v1675 = vmul.f32 %v1643, 1.0614054
        %v1676 = vadd.f32 %v1644, -1.4531521
        %v1677 = vadd.f32 %v1645, -1.4531521
        %v1678 = vadd.f32 %v1646, -1.4531521
        %v1679 = vadd.f32 %v1647, -1.4531521
        %v1680 = vadd.f32 %v1648, -1.4531521
        %v1681 = vadd.f32 %v1649, -1.4531521
        %v1682 = vadd.f32 %v1650, -1.4531521
        %v1683 = vadd.f32 %v1651, -1.4531521
        %v1684 = vadd.f32 %v1652, -1.4531521
        %v1685 = vadd.f32 %v1653, -1.4531521
        %v1686 = vadd.f32 %v1654, -1.4531521
        %v1687 = vadd.f32 %v1655, -1.4531521
        %v1688 = vadd.f32 %v1656, -1.4531521
        %v1689 = vadd.f32 %v1657, -1.4531521
        %v1690 = vadd.f32 %v1658, -1.4531521
        %v1691 = vadd.f32 %v1659, -1.4531521
        %v1692 = vadd.f32 %v1660, -1.4531521
        %v1693 = vadd.f32 %v1661, -1.4531521
        %v1694 = vadd.f32 %v1662, -1.4531521
        %v1695 = vadd.f32 %v1663, -1.4531521
        %v1696 = vadd.f32 %v1664, -1.4531521
        %v1697 = vadd.f32 %v1665, -1.4531521
        %v1698 = vadd.f32 %v1666, -1.4531521
        %v1699 = vadd.f32 %v1667, -1.4531521
        %v1700 = vadd.f32 %v1668, -1.4531521
        %v1701 = vadd.f32 %v1669, -1.4531521
        %v1702 = vadd.f32 %v1670, -1.4531521
        %v1703 = vadd.f32 %v1671, -1.4531521
        %v1704 = vadd.f32 %v1672, -1.4531521
        %v1705 = vadd.f32 %v1673, -1.4531521
        %v1706 = vadd.f32 %v1674, -1.4531521
        %v1707 = vadd.f32 %v1675, -1.4531521
        %v1708 = vmul.f32 %v1178, %v1676
        %v1709 = vmul.f32 %v1193, %v1677
        %v1710 = vmul.f32 %v1208, %v1678
        %v1711 = vmul.f32 %v1223, %v1679
        %v1712 = vmul.f32 %v1238, %v1680
        %v1713 = vmul.f32 %v1253, %v1681
        %v1714 = vmul.f32 %v1268, %v1682
        %v1715 = vmul.f32 %v1283, %v1683
        %v1716 = vmul.f32 %v1298, %v1684
        %v1717 = vmul.f32 %v1313, %v1685
        %v1718 = vmul.f32 %v1328, %v1686
        %v1719 = vmul.f32 %v1343, %v1687
        %v1720 = vmul.f32 %v1358, %v1688
        %v1721 = vmul.f32 %v1373, %v1689
        %v1722 = vmul.f32 %v1388, %v1690
        %v1723 = vmul.f32 %v1403, %v1691
        %v1724 = vmul.f32 %v1418, %v1692
        %v1725 = vmul.f32 %v1433, %v1693
        %v1726 = vmul.f32 %v1448, %v1694
        %v1727 = vmul.f32 %v1463, %v1695
        %v1728 = vmul.f32 %v1478, %v1696
        %v1729 = vmul.f32 %v1493, %v1697
        %v1730 = vmul.f32 %v1508, %v1698
        %v1731 = vmul.f32 %v1523, %v1699
        %v1732 = vmul.f32 %v1538, %v1700
        %v1733 = vmul.f32 %v1553, %v1701
        %v1734 = vmul.f32 %v1568, %v1702
        %v1735 = vmul.f32 %v1583, %v1703
        %v1736 = vmul.f32 %v1598, %v1704
        %v1737 = vmul.f32 %v1613, %v1705
        %v1738 = vmul.f32 %v1628, %v1706
        %v1739 = vmul.f32 %v1643, %v1707
        %v1740 = vadd.f32 %v1708, 1.4214138
        %v1741 = vadd.f32 %v1709, 1.4214138
        %v1742 = vadd.f32 %v1710, 1.4214138
        %v1743 = vadd.f32 %v1711, 1.4214138
        %v1744 = vadd.f32 %v1712, 1.4214138
        %v1745 = vadd.f32 %v1713, 1.4214138
        %v1746 = vadd.f32 %v1714, 1.4214138
        %v1747 = vadd.f32 %v1715, 1.4214138
        %v1748 = vadd.f32 %v1716, 1.4214138
        %v1749 = vadd.f32 %v1717, 1.4214138
        %v1750 = vadd.f32 %v1718, 1.4214138
        %v1751 = vadd.f32 %v1719, 1.4214138
        %v1752 = vadd.f32 %v1720, 1.4214138
        %v1753 = vadd.f32 %v1721, 1.4214138
        %v1754 = vadd.f32 %v1722, 1.4214138
        %v1755 = vadd.f32 %v1723, 1.4214138
        %v1756 = vadd.f32 %v1724, 1.4214138
        %v1757 = vadd.f32 %v1725, 1.4214138
        %v1758 = vadd.f32 %v1726, 1.4214138
        %v1759 = vadd.f32 %v1727, 1.4214138
        %v1760 = vadd.f32 %v1728, 1.4214138
        %v1761 = vadd.f32 %v1729, 1.4214138
        %v1762 = vadd.f32 %v1730, 1.4214138
        %v1763 = vadd.f32 %v1731, 1.4214138
        %v1764 = vadd.f32 %v1732, 1.4214138
        %v1765 = vadd.f32 %v1733, 1.4214138
        %v1766 = vadd.f32 %v1734, 1.4214138
        %v1767 = vadd.f32 %v1735, 1.4214138
        %v1768 = vadd.f32 %v1736, 1.4214138
        %v1769 = vadd.f32 %v1737, 1.4214138
        %v1770 = vadd.f32 %v1738, 1.4214138
        %v1771 = vadd.f32 %v1739, 1.4214138
        %v1772 = vmul.f32 %v1178, %v1740
        %v1773 = vmul.f32 %v1193, %v1741
        %v1774 = vmul.f32 %v1208, %v1742
        %v1775 = vmul.f32 %v1223, %v1743
        %v1776 = vmul.f32 %v1238, %v1744
        %v1777 = vmul.f32 %v1253, %v1745
        %v1778 = vmul.f32 %v1268, %v1746
        %v1779 = vmul.f32 %v1283, %v1747
        %v1780 = vmul.f32 %v1298, %v1748
        %v1781 = vmul.f32 %v1313, %v1749
        %v1782 = vmul.f32 %v1328, %v1750
        %v1783 = vmul.f32 %v1343, %v1751
        %v1784 = vmul.f32 %v1358, %v1752
        %v1785 = vmul.f32 %v1373, %v1753
        %v1786 = vmul.f32 %v1388, %v1754
        %v1787 = vmul.f32 %v1403, %v1755
        %v1788 = vmul.f32 %v1418, %v1756
        %v1789 = vmul.f32 %v1433, %v1757
        %v1790 = vmul.f32 %v1448, %v1758
        %v1791 = vmul.f32 %v1463, %v1759
        %v1792 = vmul.f32 %v1478, %v1760
        %v1793 = vmul.f32 %v1493, %v1761
        %v1794 = vmul.f32 %v1508, %v1762
        %v1795 = vmul.f32 %v1523, %v1763
        %v1796 = vmul.f32 %v1538, %v1764
        %v1797 = vmul.f32 %v1553, %v1765
        %v1798 = vmul.f32 %v1568, %v1766
        %v1799 = vmul.f32 %v1583, %v1767
        %v1800 = vmul.f32 %v1598, %v1768
        %v1801 = vmul.f32 %v1613, %v1769
        %v1802 = vmul.f32 %v1628, %v1770
        %v1803 = vmul.f32 %v1643, %v1771
        %v1804 = vadd.f32 %v1772, -0.28449672
        %v1805 = vadd.f32 %v1773, -0.28449672
        %v1806 = vadd.f32 %v1774, -0.28449672
        %v1807 = vadd.f32 %v1775, -0.28449672
        %v1808 = vadd.f32 %v1776, -0.28449672
        %v1809 = vadd.f32 %v1777, -0.28449672
        %v1810 = vadd.f32 %v1778, -0.28449672
        %v1811 = vadd.f32 %v1779, -0.28449672
        %v1812 = vadd.f32 %v1780, -0.28449672
        %v1813 = vadd.f32 %v1781, -0.28449672
        %v1814 = vadd.f32 %v1782, -0.28449672
        %v1815 = vadd.f32 %v1783, -0.28449672
        %v1816 = vadd.f32 %v1784, -0.28449672
        %v1817 = vadd.f32 %v1785, -0.28449672
        %v1818 = vadd.f32 %v1786, -0.28449672
        %v1819 = vadd.f32 %v1787, -0.28449672
        %v1820 = vadd.f32 %v1788, -0.28449672
        %v1821 = vadd.f32 %v1789, -0.28449672
        %v1822 = vadd.f32 %v1790, -0.28449672
        %v1823 = vadd.f32 %v1791, -0.28449672
        %v1824 = vadd.f32 %v1792, -0.28449672
        %v1825 = vadd.f32 %v1793, -0.28449672
        %v1826 = vadd.f32 %v1794, -0.28449672
        %v1827 = vadd.f32 %v1795, -0.28449672
        %v1828 = vadd.f32 %v1796, -0.28449672
        %v1829 = vadd.f32 %v1797, -0.28449672
        %v1830 = vadd.f32 %v1798, -0.28449672
        %v1831 = vadd.f32 %v1799, -0.28449672
        %v1832 = vadd.f32 %v1800, -0.28449672
        %v1833 = vadd.f32 %v1801, -0.28449672
        %v1834 = vadd.f32 %v1802, -0.28449672
        %v1835 = vadd.f32 %v1803, -0.28449672
        %v1836 = vmul.f32 %v1178, %v1804
        %v1837 = vmul.f32 %v1193, %v1805
        %v1838 = vmul.f32 %v1208, %v1806
        %v1839 = vmul.f32 %v1223, %v1807
        %v1840 = vmul.f32 %v1238, %v1808
        %v1841 = vmul.f32 %v1253, %v1809
        %v1842 = vmul.f32 %v1268, %v1810
        %v1843 = vmul.f32 %v1283, %v1811
        %v1844 = vmul.f32 %v1298, %v1812
        %v1845 = vmul.f32 %v1313, %v1813
        %v1846 = vmul.f32 %v1328, %v1814
        %v1847 = vmul.f32 %v1343, %v1815
        %v1848 = vmul.f32 %v1358, %v1816
        %v1849 = vmul.f32 %v1373, %v1817
        %v1850 = vmul.f32 %v1388, %v1818
        %v1851 = vmul.f32 %v1403, %v1819
        %v1852 = vmul.f32 %v1418, %v1820
        %v1853 = vmul.f32 %v1433, %v1821
        %v1854 = vmul.f32 %v1448, %v1822
        %v1855 = vmul.f32 %v1463, %v1823
        %v1856 = vmul.f32 %v1478, %v1824
        %v1857 = vmul.f32 %v1493, %v1825
        %v1858 = vmul.f32 %v1508, %v1826
        %v1859 = vmul.f32 %v1523, %v1827
        %v1860 = vmul.f32 %v1538, %v1828
        %v1861 = vmul.f32 %v1553, %v1829
        %v1862 = vmul.f32 %v1568, %v1830
        %v1863 = vmul.f32 %v1583, %v1831
        %v1864 = vmul.f32 %v1598, %v1832
        %v1865 = vmul.f32 %v1613, %v1833
        %v1866 = vmul.f32 %v1628, %v1834
        %v1867 = vmul.f32 %v1643, %v1835
        %v1868 = vadd.f32 %v1836, 0.2548296
        %v1869 = vadd.f32 %v1837, 0.2548296
        %v1870 = vadd.f32 %v1838, 0.2548296
        %v1871 = vadd.f32 %v1839, 0.2548296
        %v1872 = vadd.f32 %v1840, 0.2548296
        %v1873 = vadd.f32 %v1841, 0.2548296
        %v1874 = vadd.f32 %v1842, 0.2548296
        %v1875 = vadd.f32 %v1843, 0.2548296
        %v1876 = vadd.f32 %v1844, 0.2548296
        %v1877 = vadd.f32 %v1845, 0.2548296
        %v1878 = vadd.f32 %v1846, 0.2548296
        %v1879 = vadd.f32 %v1847, 0.2548296
        %v1880 = vadd.f32 %v1848, 0.2548296
        %v1881 = vadd.f32 %v1849, 0.2548296
        %v1882 = vadd.f32 %v1850, 0.2548296
        %v1883 = vadd.f32 %v1851, 0.2548296
        %v1884 = vadd.f32 %v1852, 0.2548296
        %v1885 = vadd.f32 %v1853, 0.2548296
        %v1886 = vadd.f32 %v1854, 0.2548296
        %v1887 = vadd.f32 %v1855, 0.2548296
        %v1888 = vadd.f32 %v1856, 0.2548296
        %v1889 = vadd.f32 %v1857, 0.2548296
        %v1890 = vadd.f32 %v1858, 0.2548296
        %v1891 = vadd.f32 %v1859, 0.2548296
        %v1892 = vadd.f32 %v1860, 0.2548296
        %v1893 = vadd.f32 %v1861, 0.2548296
        %v1894 = vadd.f32 %v1862, 0.2548296
        %v1895 = vadd.f32 %v1863, 0.2548296
        %v1896 = vadd.f32 %v1864, 0.2548296
        %v1897 = vadd.f32 %v1865, 0.2548296
        %v1898 = vadd.f32 %v1866, 0.2548296
        %v1899 = vadd.f32 %v1867, 0.2548296
        %v1900 = vmul.f32 %v1178, %v1868
        %v1901 = vmul.f32 %v1193, %v1869
        %v1902 = vmul.f32 %v1208, %v1870
        %v1903 = vmul.f32 %v1223, %v1871
        %v1904 = vmul.f32 %v1238, %v1872
        %v1905 = vmul.f32 %v1253, %v1873
        %v1906 = vmul.f32 %v1268, %v1874
        %v1907 = vmul.f32 %v1283, %v1875
        %v1908 = vmul.f32 %v1298, %v1876
        %v1909 = vmul.f32 %v1313, %v1877
        %v1910 = vmul.f32 %v1328, %v1878
        %v1911 = vmul.f32 %v1343, %v1879
        %v1912 = vmul.f32 %v1358, %v1880
        %v1913 = vmul.f32 %v1373, %v1881
        %v1914 = vmul.f32 %v1388, %v1882
        %v1915 = vmul.f32 %v1403, %v1883
        %v1916 = vmul.f32 %v1418, %v1884
        %v1917 = vmul.f32 %v1433, %v1885
        %v1918 = vmul.f32 %v1448, %v1886
        %v1919 = vmul.f32 %v1463, %v1887
        %v1920 = vmul.f32 %v1478, %v1888
        %v1921 = vmul.f32 %v1493, %v1889
        %v1922 = vmul.f32 %v1508, %v1890
        %v1923 = vmul.f32 %v1523, %v1891
        %v1924 = vmul.f32 %v1538, %v1892
        %v1925 = vmul.f32 %v1553, %v1893
        %v1926 = vmul.f32 %v1568, %v1894
        %v1927 = vmul.f32 %v1583, %v1895
        %v1928 = vmul.f32 %v1598, %v1896
        %v1929 = vmul.f32 %v1613, %v1897
        %v1930 = vmul.f32 %v1628, %v1898
        %v1931 = vmul.f32 %v1643, %v1899
        %v1932 = vsub.f32 0.0, %v1068
        %v1933 = vsub.f32 0.0, %v1069
        %v1934 = vsub.f32 0.0, %v1070
        %v1935 = vsub.f32 0.0, %v1071
        %v1936 = vsub.f32 0.0, %v1072
        %v1937 = vsub.f32 0.0, %v1073
        %v1938 = vsub.f32 0.0, %v1074
        %v1939 = vsub.f32 0.0, %v1075
        %v1940 = vsub.f32 0.0, %v1076
        %v1941 = vsub.f32 0.0, %v1077
        %v1942 = vsub.f32 0.0, %v1078
        %v1943 = vsub.f32 0.0, %v1079
        %v1944 = vsub.f32 0.0, %v1080
        %v1945 = vsub.f32 0.0, %v1081
        %v1946 = vsub.f32 0.0, %v1082
        %v1947 = vsub.f32 0.0, %v1083
        %v1948 = vsub.f32 0.0, %v1084
        %v1949 = vsub.f32 0.0, %v1085
        %v1950 = vsub.f32 0.0, %v1086
        %v1951 = vsub.f32 0.0, %v1087
        %v1952 = vsub.f32 0.0, %v1088
        %v1953 = vsub.f32 0.0, %v1089
        %v1954 = vsub.f32 0.0, %v1090
        %v1955 = vsub.f32 0.0, %v1091
        %v1956 = vsub.f32 0.0, %v1092
        %v1957 = vsub.f32 0.0, %v1093
        %v1958 = vsub.f32 0.0, %v1094
        %v1959 = vsub.f32 0.0, %v1095
        %v1960 = vsub.f32 0.0, %v1096
        %v1961 = vsub.f32 0.0, %v1097
        %v1962 = vsub.f32 0.0, %v1098
        %v1963 = vsub.f32 0.0, %v1099
        %v1964 = vmul.f32 %v1932, %v1068
        %v1965 = vmul.f32 %v1933, %v1069
        %v1966 = vmul.f32 %v1934, %v1070
        %v1967 = vmul.f32 %v1935, %v1071
        %v1968 = vmul.f32 %v1936, %v1072
        %v1969 = vmul.f32 %v1937, %v1073
        %v1970 = vmul.f32 %v1938, %v1074
        %v1971 = vmul.f32 %v1939, %v1075
        %v1972 = vmul.f32 %v1940, %v1076
        %v1973 = vmul.f32 %v1941, %v1077
        %v1974 = vmul.f32 %v1942, %v1078
        %v1975 = vmul.f32 %v1943, %v1079
        %v1976 = vmul.f32 %v1944, %v1080
        %v1977 = vmul.f32 %v1945, %v1081
        %v1978 = vmul.f32 %v1946, %v1082
        %v1979 = vmul.f32 %v1947, %v1083
        %v1980 = vmul.f32 %v1948, %v1084
        %v1981 = vmul.f32 %v1949, %v1085
        %v1982 = vmul.f32 %v1950, %v1086
        %v1983 = vmul.f32 %v1951, %v1087
        %v1984 = vmul.f32 %v1952, %v1088
        %v1985 = vmul.f32 %v1953, %v1089
        %v1986 = vmul.f32 %v1954, %v1090
        %v1987 = vmul.f32 %v1955, %v1091
        %v1988 = vmul.f32 %v1956, %v1092
        %v1989 = vmul.f32 %v1957, %v1093
        %v1990 = vmul.f32 %v1958, %v1094
        %v1991 = vmul.f32 %v1959, %v1095
        %v1992 = vmul.f32 %v1960, %v1096
        %v1993 = vmul.f32 %v1961, %v1097
        %v1994 = vmul.f32 %v1962, %v1098
        %v1995 = vmul.f32 %v1963, %v1099
        %v1996 = vmul.f32 %v1964, 1.442695
        %v1997 = vpow.pop %v1996
        %v1998 = vmul.f32 %v1965, 1.442695
        %v1999 = vpow.pop %v1998
        %v2000 = vmul.f32 %v1966, 1.442695
        %v2001 = vpow.pop %v2000
        %v2002 = vmul.f32 %v1967, 1.442695
        %v2003 = vpow.pop %v2002
        %v2004 = vmul.f32 %v1968, 1.442695
        %v2005 = vpow.pop %v2004
        %v2006 = vmul.f32 %v1969, 1.442695
        %v2007 = vpow.pop %v2006
        %v2008 = vmul.f32 %v1970, 1.442695
        %v2009 = vpow.pop %v2008
        %v2010 = vmul.f32 %v1971, 1.442695
        %v2011 = vpow.pop %v2010
        %v2012 = vmul.f32 %v1972, 1.442695
        %v2013 = vpow.pop %v2012
        %v2014 = vmul.f32 %v1973, 1.442695
        %v2015 = vpow.pop %v2014
        %v2016 = vmul.f32 %v1974, 1.442695
        %v2017 = vpow.pop %v2016
        %v2018 = vmul.f32 %v1975, 1.442695
        %v2019 = vpow.pop %v2018
        %v2020 = vmul.f32 %v1976, 1.442695
        %v2021 = vpow.pop %v2020
        %v2022 = vmul.f32 %v1977, 1.442695
        %v2023 = vpow.pop %v2022
        %v2024 = vmul.f32 %v1978, 1.442695
        %v2025 = vpow.pop %v2024
        %v2026 = vmul.f32 %v1979, 1.442695
        %v2027 = vpow.pop %v2026
        %v2028 = vmul.f32 %v1980, 1.442695
        %v2029 = vpow.pop %v2028
        %v2030 = vmul.f32 %v1981, 1.442695
        %v2031 = vpow.pop %v2030
        %v2032 = vmul.f32 %v1982, 1.442695
        %v2033 = vpow.pop %v2032
        %v2034 = vmul.f32 %v1983, 1.442695
        %v2035 = vpow.pop %v2034
        %v2036 = vmul.f32 %v1984, 1.442695
        %v2037 = vpow.pop %v2036
        %v2038 = vmul.f32 %v1985, 1.442695
        %v2039 = vpow.pop %v2038
        %v2040 = vmul.f32 %v1986, 1.442695
        %v2041 = vpow.pop %v2040
        %v2042 = vmul.f32 %v1987, 1.442695
        %v2043 = vpow.pop %v2042
        %v2044 = vmul.f32 %v1988, 1.442695
        %v2045 = vpow.pop %v2044
        %v2046 = vmul.f32 %v1989, 1.442695
        %v2047 = vpow.pop %v2046
        %v2048 = vmul.f32 %v1990, 1.442695
        %v2049 = vpow.pop %v2048
        %v2050 = vmul.f32 %v1991, 1.442695
        %v2051 = vpow.pop %v2050
        %v2052 = vmul.f32 %v1992, 1.442695
        %v2053 = vpow.pop %v2052
        %v2054 = vmul.f32 %v1993, 1.442695
        %v2055 = vpow.pop %v2054
        %v2056 = vmul.f32 %v1994, 1.442695
        %v2057 = vpow.pop %v2056
        %v2058 = vmul.f32 %v1995, 1.442695
        %v2059 = vpow.pop %v2058
        %v2060 = vmul.f32 %v1900, %v1997
        %v2061 = vmul.f32 %v1901, %v1999
        %v2062 = vmul.f32 %v1902, %v2001
        %v2063 = vmul.f32 %v1903, %v2003
        %v2064 = vmul.f32 %v1904, %v2005
        %v2065 = vmul.f32 %v1905, %v2007
        %v2066 = vmul.f32 %v1906, %v2009
        %v2067 = vmul.f32 %v1907, %v2011
        %v2068 = vmul.f32 %v1908, %v2013
        %v2069 = vmul.f32 %v1909, %v2015
        %v2070 = vmul.f32 %v1910, %v2017
        %v2071 = vmul.f32 %v1911, %v2019
        %v2072 = vmul.f32 %v1912, %v2021
        %v2073 = vmul.f32 %v1913, %v2023
        %v2074 = vmul.f32 %v1914, %v2025
        %v2075 = vmul.f32 %v1915, %v2027
        %v2076 = vmul.f32 %v1916, %v2029
        %v2077 = vmul.f32 %v1917, %v2031
        %v2078 = vmul.f32 %v1918, %v2033
        %v2079 = vmul.f32 %v1919, %v2035
        %v2080 = vmul.f32 %v1920, %v2037
        %v2081 = vmul.f32 %v1921, %v2039
        %v2082 = vmul.f32 %v1922, %v2041
        %v2083 = vmul.f32 %v1923, %v2043
        %v2084 = vmul.f32 %v1924, %v2045
        %v2085 = vmul.f32 %v1925, %v2047
        %v2086 = vmul.f32 %v1926, %v2049
        %v2087 = vmul.f32 %v1927, %v2051
        %v2088 = vmul.f32 %v1928, %v2053
        %v2089 = vmul.f32 %v1929, %v2055
        %v2090 = vmul.f32 %v1930, %v2057
        %v2091 = vmul.f32 %v1931, %v2059
        %v2092 = vsub.f32 1.0, %v2060
        %v2093 = vsub.f32 1.0, %v2061
        %v2094 = vsub.f32 1.0, %v2062
        %v2095 = vsub.f32 1.0, %v2063
        %v2096 = vsub.f32 1.0, %v2064
        %v2097 = vsub.f32 1.0, %v2065
        %v2098 = vsub.f32 1.0, %v2066
        %v2099 = vsub.f32 1.0, %v2067
        %v2100 = vsub.f32 1.0, %v2068
        %v2101 = vsub.f32 1.0, %v2069
        %v2102 = vsub.f32 1.0, %v2070
        %v2103 = vsub.f32 1.0, %v2071
        %v2104 = vsub.f32 1.0, %v2072
        %v2105 = vsub.f32 1.0, %v2073
        %v2106 = vsub.f32 1.0, %v2074
        %v2107 = vsub.f32 1.0, %v2075
        %v2108 = vsub.f32 1.0, %v2076
        %v2109 = vsub.f32 1.0, %v2077
        %v2110 = vsub.f32 1.0, %v2078
        %v2111 = vsub.f32 1.0, %v2079
        %v2112 = vsub.f32 1.0, %v2080
        %v2113 = vsub.f32 1.0, %v2081
        %v2114 = vsub.f32 1.0, %v2082
        %v2115 = vsub.f32 1.0, %v2083
        %v2116 = vsub.f32 1.0, %v2084
        %v2117 = vsub.f32 1.0, %v2085
        %v2118 = vsub.f32 1.0, %v2086
        %v2119 = vsub.f32 1.0, %v2087
        %v2120 = vsub.f32 1.0, %v2088
        %v2121 = vsub.f32 1.0, %v2089
        %v2122 = vsub.f32 1.0, %v2090
        %v2123 = vsub.f32 1.0, %v2091
        %vm2124 = vcmp.ge.f32.partialorder %v1036, 0.0
        %vm2125 = vcmp.ge.f32.partialorder %v1037, 0.0
        %vm2126 = vcmp.ge.f32.partialorder %v1038, 0.0
        %vm2127 = vcmp.ge.f32.partialorder %v1039, 0.0
        %vm2128 = vcmp.ge.f32.partialorder %v1040, 0.0
        %vm2129 = vcmp.ge.f32.partialorder %v1041, 0.0
        %vm2130 = vcmp.ge.f32.partialorder %v1042, 0.0
        %vm2131 = vcmp.ge.f32.partialorder %v1043, 0.0
        %vm2132 = vcmp.ge.f32.partialorder %v1044, 0.0
        %vm2133 = vcmp.ge.f32.partialorder %v1045, 0.0
        %vm2134 = vcmp.ge.f32.partialorder %v1046, 0.0
        %vm2135 = vcmp.ge.f32.partialorder %v1047, 0.0
        %vm2136 = vcmp.ge.f32.partialorder %v1048, 0.0
        %vm2137 = vcmp.ge.f32.partialorder %v1049, 0.0
        %vm2138 = vcmp.ge.f32.partialorder %v1050, 0.0
        %vm2139 = vcmp.ge.f32.partialorder %v1051, 0.0
        %vm2140 = vcmp.ge.f32.partialorder %v1052, 0.0
        %vm2141 = vcmp.ge.f32.partialorder %v1053, 0.0
        %vm2142 = vcmp.ge.f32.partialorder %v1054, 0.0
        %vm2143 = vcmp.ge.f32.partialorder %v1055, 0.0
        %vm2144 = vcmp.ge.f32.partialorder %v1056, 0.0
        %vm2145 = vcmp.ge.f32.partialorder %v1057, 0.0
        %vm2146 = vcmp.ge.f32.partialorder %v1058, 0.0
        %vm2147 = vcmp.ge.f32.partialorder %v1059, 0.0
        %vm2148 = vcmp.ge.f32.partialorder %v1060, 0.0
        %vm2149 = vcmp.ge.f32.partialorder %v1061, 0.0
        %vm2150 = vcmp.ge.f32.partialorder %v1062, 0.0
        %vm2151 = vcmp.ge.f32.partialorder %v1063, 0.0
        %vm2152 = vcmp.ge.f32.partialorder %v1064, 0.0
        %vm2153 = vcmp.ge.f32.partialorder %v1065, 0.0
        %vm2154 = vcmp.ge.f32.partialorder %v1066, 0.0
        %vm2155 = vcmp.ge.f32.partialorder %v1067, 0.0
        %v2156 = vsub.f32 0.0, %v2092
        %v2157 = vsub.f32 0.0, %v2093
        %v2158 = vsub.f32 0.0, %v2094
        %v2159 = vsub.f32 0.0, %v2095
        %v2160 = vsub.f32 0.0, %v2096
        %v2161 = vsub.f32 0.0, %v2097
        %v2162 = vsub.f32 0.0, %v2098
        %v2163 = vsub.f32 0.0, %v2099
        %v2164 = vsub.f32 0.0, %v2100
        %v2165 = vsub.f32 0.0, %v2101
        %v2166 = vsub.f32 0.0, %v2102
        %v2167 = vsub.f32 0.0, %v2103
        %v2168 = vsub.f32 0.0, %v2104
        %v2169 = vsub.f32 0.0, %v2105
        %v2170 = vsub.f32 0.0, %v2106
        %v2171 = vsub.f32 0.0, %v2107
        %v2172 = vsub.f32 0.0, %v2108
        %v2173 = vsub.f32 0.0, %v2109
        %v2174 = vsub.f32 0.0, %v2110
        %v2175 = vsub.f32 0.0, %v2111
        %v2176 = vsub.f32 0.0, %v2112
        %v2177 = vsub.f32 0.0, %v2113
        %v2178 = vsub.f32 0.0, %v2114
        %v2179 = vsub.f32 0.0, %v2115
        %v2180 = vsub.f32 0.0, %v2116
        %v2181 = vsub.f32 0.0, %v2117
        %v2182 = vsub.f32 0.0, %v2118
        %v2183 = vsub.f32 0.0, %v2119
        %v2184 = vsub.f32 0.0, %v2120
        %v2185 = vsub.f32 0.0, %v2121
        %v2186 = vsub.f32 0.0, %v2122
        %v2187 = vsub.f32 0.0, %v2123
        %v2188 = vsel %vm2124, %v2092, %v2156
        %v2189 = vsel %vm2125, %v2093, %v2157
        %v2190 = vsel %vm2126, %v2094, %v2158
        %v2191 = vsel %vm2127, %v2095, %v2159
        %v2192 = vsel %vm2128, %v2096, %v2160
        %v2193 = vsel %vm2129, %v2097, %v2161
        %v2194 = vsel %vm2130, %v2098, %v2162
        %v2195 = vsel %vm2131, %v2099, %v2163
        %v2196 = vsel %vm2132, %v2100, %v2164
        %v2197 = vsel %vm2133, %v2101, %v2165
        %v2198 = vsel %vm2134, %v2102, %v2166
        %v2199 = vsel %vm2135, %v2103, %v2167
        %v2200 = vsel %vm2136, %v2104, %v2168
        %v2201 = vsel %vm2137, %v2105, %v2169
        %v2202 = vsel %vm2138, %v2106, %v2170
        %v2203 = vsel %vm2139, %v2107, %v2171
        %v2204 = vsel %vm2140, %v2108, %v2172
        %v2205 = vsel %vm2141, %v2109, %v2173
        %v2206 = vsel %vm2142, %v2110, %v2174
        %v2207 = vsel %vm2143, %v2111, %v2175
        %v2208 = vsel %vm2144, %v2112, %v2176
        %v2209 = vsel %vm2145, %v2113, %v2177
        %v2210 = vsel %vm2146, %v2114, %v2178
        %v2211 = vsel %vm2147, %v2115, %v2179
        %v2212 = vsel %vm2148, %v2116, %v2180
        %v2213 = vsel %vm2149, %v2117, %v2181
        %v2214 = vsel %vm2150, %v2118, %v2182
        %v2215 = vsel %vm2151, %v2119, %v2183
        %v2216 = vsel %vm2152, %v2120, %v2184
        %v2217 = vsel %vm2153, %v2121, %v2185
        %v2218 = vsel %vm2154, %v2122, %v2186
        %v2219 = vsel %vm2155, %v2123, %v2187
        %v2220 = vmul.f32 %v1004, 0.5
        %v2221 = vmul.f32 %v1005, 0.5
        %v2222 = vmul.f32 %v1006, 0.5
        %v2223 = vmul.f32 %v1007, 0.5
        %v2224 = vmul.f32 %v1008, 0.5
        %v2225 = vmul.f32 %v1009, 0.5
        %v2226 = vmul.f32 %v1010, 0.5
        %v2227 = vmul.f32 %v1011, 0.5
        %v2228 = vmul.f32 %v1012, 0.5
        %v2229 = vmul.f32 %v1013, 0.5
        %v2230 = vmul.f32 %v1014, 0.5
        %v2231 = vmul.f32 %v1015, 0.5
        %v2232 = vmul.f32 %v1016, 0.5
        %v2233 = vmul.f32 %v1017, 0.5
        %v2234 = vmul.f32 %v1018, 0.5
        %v2235 = vmul.f32 %v1019, 0.5
        %v2236 = vmul.f32 %v1020, 0.5
        %v2237 = vmul.f32 %v1021, 0.5
        %v2238 = vmul.f32 %v1022, 0.5
        %v2239 = vmul.f32 %v1023, 0.5
        %v2240 = vmul.f32 %v1024, 0.5
        %v2241 = vmul.f32 %v1025, 0.5
        %v2242 = vmul.f32 %v1026, 0.5
        %v2243 = vmul.f32 %v1027, 0.5
        %v2244 = vmul.f32 %v1028, 0.5
        %v2245 = vmul.f32 %v1029, 0.5
        %v2246 = vmul.f32 %v1030, 0.5
        %v2247 = vmul.f32 %v1031, 0.5
        %v2248 = vmul.f32 %v1032, 0.5
        %v2249 = vmul.f32 %v1033, 0.5
        %v2250 = vmul.f32 %v1034, 0.5
        %v2251 = vmul.f32 %v1035, 0.5
        %v2252 = vadd.f32 %v2188, 1.0
        %v2253 = vadd.f32 %v2189, 1.0
        %v2254 = vadd.f32 %v2190, 1.0
        %v2255 = vadd.f32 %v2191, 1.0
        %v2256 = vadd.f32 %v2192, 1.0
        %v2257 = vadd.f32 %v2193, 1.0
        %v2258 = vadd.f32 %v2194, 1.0
        %v2259 = vadd.f32 %v2195, 1.0
        %v2260 = vadd.f32 %v2196, 1.0
        %v2261 = vadd.f32 %v2197, 1.0
        %v2262 = vadd.f32 %v2198, 1.0
        %v2263 = vadd.f32 %v2199, 1.0
        %v2264 = vadd.f32 %v2200, 1.0
        %v2265 = vadd.f32 %v2201, 1.0
        %v2266 = vadd.f32 %v2202, 1.0
        %v2267 = vadd.f32 %v2203, 1.0
        %v2268 = vadd.f32 %v2204, 1.0
        %v2269 = vadd.f32 %v2205, 1.0
        %v2270 = vadd.f32 %v2206, 1.0
        %v2271 = vadd.f32 %v2207, 1.0
        %v2272 = vadd.f32 %v2208, 1.0
        %v2273 = vadd.f32 %v2209, 1.0
        %v2274 = vadd.f32 %v2210, 1.0
        %v2275 = vadd.f32 %v2211, 1.0
        %v2276 = vadd.f32 %v2212, 1.0
        %v2277 = vadd.f32 %v2213, 1.0
        %v2278 = vadd.f32 %v2214, 1.0
        %v2279 = vadd.f32 %v2215, 1.0
        %v2280 = vadd.f32 %v2216, 1.0
        %v2281 = vadd.f32 %v2217, 1.0
        %v2282 = vadd.f32 %v2218, 1.0
        %v2283 = vadd.f32 %v2219, 1.0
        %v2284 = vmul.f32 %v2220, %v2252
        %v2285 = vmul.f32 %v2221, %v2253
        %v2286 = vmul.f32 %v2222, %v2254
        %v2287 = vmul.f32 %v2223, %v2255
        %v2288 = vmul.f32 %v2224, %v2256
        %v2289 = vmul.f32 %v2225, %v2257
        %v2290 = vmul.f32 %v2226, %v2258
        %v2291 = vmul.f32 %v2227, %v2259
        %v2292 = vmul.f32 %v2228, %v2260
        %v2293 = vmul.f32 %v2229, %v2261
        %v2294 = vmul.f32 %v2230, %v2262
        %v2295 = vmul.f32 %v2231, %v2263
        %v2296 = vmul.f32 %v2232, %v2264
        %v2297 = vmul.f32 %v2233, %v2265
        %v2298 = vmul.f32 %v2234, %v2266
        %v2299 = vmul.f32 %v2235, %v2267
        %v2300 = vmul.f32 %v2236, %v2268
        %v2301 = vmul.f32 %v2237, %v2269
        %v2302 = vmul.f32 %v2238, %v2270
        %v2303 = vmul.f32 %v2239, %v2271
        %v2304 = vmul.f32 %v2240, %v2272
        %v2305 = vmul.f32 %v2241, %v2273
        %v2306 = vmul.f32 %v2242, %v2274
        %v2307 = vmul.f32 %v2243, %v2275
        %v2308 = vmul.f32 %v2244, %v2276
        %v2309 = vmul.f32 %v2245, %v2277
        %v2310 = vmul.f32 %v2246, %v2278
        %v2311 = vmul.f32 %v2247, %v2279
        %v2312 = vmul.f32 %v2248, %v2280
        %v2313 = vmul.f32 %v2249, %v2281
        %v2314 = vmul.f32 %v2250, %v2282
        %v2315 = vmul.f32 %v2251, %v2283
        %v2316 = vpack.c.bf16 %v2284, %v2284
        %v2317 = vpack.c.bf16 %v2285, %v2285
        %v2318 = vpack.c.bf16 %v2286, %v2286
        %v2319 = vpack.c.bf16 %v2287, %v2287
        %v2320 = vpack.c.bf16 %v2288, %v2288
        %v2321 = vpack.c.bf16 %v2289, %v2289
        %v2322 = vpack.c.bf16 %v2290, %v2290
        %v2323 = vpack.c.bf16 %v2291, %v2291
        %v2324 = vpack.c.bf16 %v2292, %v2292
        %v2325 = vpack.c.bf16 %v2293, %v2293
        %v2326 = vpack.c.bf16 %v2294, %v2294
        %v2327 = vpack.c.bf16 %v2295, %v2295
        %v2328 = vpack.c.bf16 %v2296, %v2296
        %v2329 = vpack.c.bf16 %v2297, %v2297
        %v2330 = vpack.c.bf16 %v2298, %v2298
        %v2331 = vpack.c.bf16 %v2299, %v2299
        %v2332 = vpack.c.bf16 %v2300, %v2300
        %v2333 = vpack.c.bf16 %v2301, %v2301
        %v2334 = vpack.c.bf16 %v2302, %v2302
        %v2335 = vpack.c.bf16 %v2303, %v2303
        %v2336 = vpack.c.bf16 %v2304, %v2304
        %v2337 = vpack.c.bf16 %v2305, %v2305
        %v2338 = vpack.c.bf16 %v2306, %v2306
        %v2339 = vpack.c.bf16 %v2307, %v2307
        %v2340 = vpack.c.bf16 %v2308, %v2308
        %v2341 = vpack.c.bf16 %v2309, %v2309
        %v2342 = vpack.c.bf16 %v2310, %v2310
        %v2343 = vpack.c.bf16 %v2311, %v2311
        %v2344 = vpack.c.bf16 %v2312, %v2312
        %v2345 = vpack.c.bf16 %v2313, %v2313
        %v2346 = vpack.c.bf16 %v2314, %v2314
        %v2347 = vpack.c.bf16 %v2315, %v2315
        %vm2348 = vcmask 519168
        %2349 = vst.msk [vmem:[%s306] sm:$0xf] %vm2348, %v2316
        %2350 = vst.msk [vmem:[%s306 + $0x4] sm:$0xf] %vm2348, %v2317
        %2351 = vst.msk [vmem:[%s306 + $0x8] sm:$0xf] %vm2348, %v2318
        %2352 = vst.msk [vmem:[%s306 + $0xc] sm:$0xf] %vm2348, %v2319
        %2353 = vst.msk [vmem:[%s306 + $0x10] sm:$0xf] %vm2348, %v2320
        %2354 = vst.msk [vmem:[%s306 + $0x14] sm:$0xf] %vm2348, %v2321
        %2355 = vst.msk [vmem:[%s306 + $0x18] sm:$0xf] %vm2348, %v2322
        %2356 = vst.msk [vmem:[%s306 + $0x1c] sm:$0xf] %vm2348, %v2323
        %2357 = vst.msk [vmem:[%s306 + $0x20] sm:$0xf] %vm2348, %v2324
        %2358 = vst.msk [vmem:[%s306 + $0x24] sm:$0xf] %vm2348, %v2325
        %2359 = vst.msk [vmem:[%s306 + $0x28] sm:$0xf] %vm2348, %v2326
        %2360 = vst.msk [vmem:[%s306 + $0x2c] sm:$0xf] %vm2348, %v2327
        %2361 = vst.msk [vmem:[%s306 + $0x30] sm:$0xf] %vm2348, %v2328
        %2362 = vst.msk [vmem:[%s306 + $0x34] sm:$0xf] %vm2348, %v2329
        %2363 = vst.msk [vmem:[%s306 + $0x38] sm:$0xf] %vm2348, %v2330
        %2364 = vst.msk [vmem:[%s306 + $0x3c] sm:$0xf] %vm2348, %v2331
        %2365 = vst.msk [vmem:[%s306 + $0x40] sm:$0xf] %vm2348, %v2332
        %2366 = vst.msk [vmem:[%s306 + $0x44] sm:$0xf] %vm2348, %v2333
        %2367 = vst.msk [vmem:[%s306 + $0x48] sm:$0xf] %vm2348, %v2334
        %2368 = vst.msk [vmem:[%s306 + $0x4c] sm:$0xf] %vm2348, %v2335
        %2369 = vst.msk [vmem:[%s306 + $0x50] sm:$0xf] %vm2348, %v2336
        %2370 = vst.msk [vmem:[%s306 + $0x54] sm:$0xf] %vm2348, %v2337
        %2371 = vst.msk [vmem:[%s306 + $0x58] sm:$0xf] %vm2348, %v2338
        %2372 = vst.msk [vmem:[%s306 + $0x5c] sm:$0xf] %vm2348, %v2339
        %2373 = vst.msk [vmem:[%s306 + $0x60] sm:$0xf] %vm2348, %v2340
        %2374 = vst.msk [vmem:[%s306 + $0x64] sm:$0xf] %vm2348, %v2341
        %2375 = vst.msk [vmem:[%s306 + $0x68] sm:$0xf] %vm2348, %v2342
        %2376 = vst.msk [vmem:[%s306 + $0x6c] sm:$0xf] %vm2348, %v2343
        %2377 = vst.msk [vmem:[%s306 + $0x70] sm:$0xf] %vm2348, %v2344
        %2378 = vst.msk [vmem:[%s306 + $0x74] sm:$0xf] %vm2348, %v2345
        %2379 = vst.msk [vmem:[%s306 + $0x78] sm:$0xf] %vm2348, %v2346
        %2380 = vst.msk [vmem:[%s306 + $0x7c] sm:$0xf] %vm2348, %v2347
      $region44: #{tpu_custom_call.1} parent=35 // pred_fallthru
        _
      %s2381 = smul.u32 32, %s20
      %p2382 = scmp.lt.s32.totalorder %s2381, 255
      %s2383 = scalar_select %p2382, %s2381, 255
      %p2384 = scmp.lt.s32.totalorder %s21, 0
      %s2385 = scalar_select %p2384, %s21, 0
      %s2386 = sadd.s32 %s2385, %s2383
      %s2387 = smul.addr %s2386, 4
      %s2388 = scalar_lea.vmem %s4, %s2387
      // Predicated region
      $region45: #{tpu_custom_call.1} parent=35 // pred_check
        %p2389 = pneg %p162
      $region46: #{tpu_custom_call.1} parent=35 // pred_check_branch
        %2391 = sbr.rel (%p2389) target = $region48
      $region47: #{tpu_custom_call.1} parent=35 // pred_region
        %s2392 = smul.u32 32, %s20
      $region48: #{tpu_custom_call.1} parent=35 // pred_fallthru
        _
    $region36: #{tpu_custom_call.1} parent=5 // pred_fallthru
      _
    %p2393 = scmp.le.s32.totalorder 2, %s10
    // Predicated region
    $region49: #{tpu_custom_call.1} parent=5 // pred_check
      %p2394 = pneg %p2393
    $region50: #{tpu_custom_call.1} parent=5 // pred_check_branch
      %2396 = sbr.rel (%p2394) target = $region52
    $region51: #{tpu_custom_call.1} parent=5 // pred_region
      %s2397 = ssub.s32 %s10, 2
      // Predicated region
      $region53: #{tpu_custom_call.1} parent=51 // pred_check
        %p2398 = pneg %p168
      $region54: #{tpu_custom_call.1} parent=51 // pred_check_branch
        %2400 = sbr.rel (%p2398) target = $region56
      $region55: #{tpu_custom_call.1} parent=51 // pred_region
        %s2401 = smul.u32 32, %s23
        %p2402 = scmp.lt.s32.totalorder %s2401, 255
        %s2403 = scalar_select %p2402, %s2401, 255
        %p2404 = scmp.lt.s32.totalorder %s24, 0
        %s2405 = scalar_select %p2404, %s24, 0
        %s2406 = sadd.s32 %s2405, %s2403
        %s2407 = smul.addr %s2406, 4
        %s2408 = scalar_lea.vmem %s4, %s2407
      $region56: #{tpu_custom_call.1} parent=51 // pred_fallthru
        _
    $region52: #{tpu_custom_call.1} parent=5 // pred_fallthru
      _
  $region6: #{tpu_custom_call.1} parent=0 // loop_footer
    %s14 = sadd.s32 1, %s10
  $region7: #{tpu_custom_call.1} parent=0 // loop_footer_branch
    %9 = sbr.rel target = $region3
  $region8: #{tpu_custom_call.1} parent=0 // loop_exit
    _

</llo_original>
